<compile_context>
chip_gen: v7x
topology: tpu7x:2x2x1
jax: 0.10.0
libtpu: 0.0.40
codegen_flags: <defaults>
</compile_context>

<pallas_src>
import math

import jax
import jax.numpy as jnp
from jax.experimental import pallas as pl
from jax.experimental.pallas import tpu as pltpu


# ---------------------------------------------------------------------------
# Fused kernel: one program per batch element, everything channels-first (C, N)
# ---------------------------------------------------------------------------
def val_fused_kernel(img_ref, text_ref, w1i_ref, w1t_ref, b1_ref,
                     wch_ref, bch_ref, spT_ref, bsp_ref,
                     wq_ref, wk_ref, wv_ref, wo_ref, w2_ref, b2_ref, a_ref,
                     out_ref):
    f32 = jnp.float32
    img = img_ref[...]                                    # (C, N) channels-first
    C, N = img.shape
    n_heads, hd, _ = wq_ref.shape
    scale = 1.0 / math.sqrt(hd)

    # ---- conv1 (1x1 over cat(img, broadcast(text))): channel matmul + text offset
    v1 = jnp.dot(w1i_ref[...], img, preferred_element_type=f32)            # (C, N)
    tproj = jnp.sum(w1t_ref[...] * text_ref[...], axis=1, keepdims=True)   # (C, 1)
    v1 = v1 + tproj + b1_ref[...]                                          # (C, N)

    # ---- v1 -> (N, C) once for the attention / channel-gate path.
    #      Done as an MXU identity matmul (plain NT dot), keeping every op in the
    #      well-supported NN/NT lowering set instead of an XLU transpose.
    rows = jax.lax.broadcasted_iota(jnp.int32, (N, N), 0)
    cols = jax.lax.broadcasted_iota(jnp.int32, (N, N), 1)
    eye = (rows == cols).astype(f32)
    v1_nc = jnp.einsum('nm,cm->nc', eye, v1, preferred_element_type=f32)   # (N, C)

    # ---- channel gate: mean over space, 1x1 conv, sigmoid  -> column (C, 1)
    gate_ch = jnp.mean(v1_nc, axis=0, keepdims=True)                       # (1, C)
    att_ch = jax.nn.sigmoid(
        jnp.sum(wch_ref[...] * gate_ch, axis=1, keepdims=True) + bch_ref[...])   # (C, 1)

    # ---- spatial gate: mean over channels, 3x3 conv (as (N, N) weight matrix), sigmoid
    gate_sp = jnp.mean(v1_nc, axis=1, keepdims=True)                       # (N, 1)
    att_sp = jax.nn.sigmoid(
        jnp.sum(spT_ref[...] * gate_sp, axis=0, keepdims=True) + bsp_ref[...])   # (1, N)

    # ---- 2-head self-attention over the N spatial positions
    # TODO(synk): flash-tile the (N, N) score block and tile over N with a BlockSpec
    # if H*W is ever scaled up (v7x has only 64 MiB VMEM); unnecessary at N=64.
    self_att = jnp.zeros((C, N), f32)
    for h in range(n_heads):                                               # unrolled
        q = jnp.einsum('nc,dc->nd', v1_nc, wq_ref[h],
                       preferred_element_type=f32) * scale                 # (N, hd)
        k = jnp.einsum('nc,dc->nd', v1_nc, wk_ref[h],
                       preferred_element_type=f32)                         # (N, hd)
        v = jnp.einsum('nc,dc->nd', v1_nc, wv_ref[h],
                       preferred_element_type=f32)                         # (N, hd)
        s = jnp.einsum('nd,md->nm', q, k, preferred_element_type=f32)      # (N, N)
        s = s - jnp.max(s, axis=-1, keepdims=True)
        p = jnp.exp(s)
        p = p * pl.reciprocal(jnp.sum(p, axis=-1, keepdims=True), approx=True)
        o = jnp.dot(p, v, preferred_element_type=f32)                      # (N, hd)
        # per-head out-projection straight back to channels-first
        self_att = self_att + jnp.einsum('od,nd->on', wo_ref[h], o,
                                         preferred_element_type=f32)       # (C, N)

    # ---- conv2 (1x1)
    sa2 = jnp.dot(w2_ref[...], self_att, preferred_element_type=f32) + b2_ref[...]

    # ---- joint gate + final mix
    joint = att_ch * att_sp                                                # (C, N)
    a0 = a_ref[0:1, 0:1]
    a1 = a_ref[0:1, 1:2]
    out_ref[...] = a0 * joint * img + a1 * sa2


# ---------------------------------------------------------------------------
# Wrapper: free reshapes + parameter preprocessing + pallas_call plumbing
# ---------------------------------------------------------------------------
def _sp_conv_matrix(w_sp, H, W):
    """(N, N) matrix M so that (3x3 conv, padding=1)(x)[p] = sum_q M[p, q] * x[q]."""
    N = H * W
    idx = jnp.arange(N)
    py, px = idx // W, idx % W
    dy = py[None, :] - py[:, None]          # dy[p, q] = y(q) - y(p)
    dx = px[None, :] - px[:, None]
    valid = (jnp.abs(dy) <= 1) & (jnp.abs(dx) <= 1)
    wv = w_sp[jnp.clip(dy + 1, 0, 2), jnp.clip(dx + 1, 0, 2)]
    return jnp.where(valid, wv, 0.0).astype(jnp.float32)


def val_forward(img_nchw, text, params, n_heads=2):
    B, C, H, W = img_nchw.shape
    D = text.shape[1]
    N = H * W
    hd = C // n_heads
    f32 = jnp.float32

    # Free, row-major-preserving layout changes (no HBM transposes).
    img = img_nchw.reshape(B, C, N)
    text3 = text.reshape(B, 1, D)

    # ---- parameter-only preprocessing (cheap, done once per call under jit) ----
    w1 = params['w1']
    w1i = w1[:, :C]                                       # (C, C)  img part of conv1
    w1t = w1[:, C:]                                       # (C, D)  text part of conv1
    b1 = params['b1'].reshape(C, 1)
    w_ch = params['w_ch']                                 # (C, C)
    b_ch = params['b_ch'].reshape(C, 1)
    spT = _sp_conv_matrix(params['w_sp'], H, W).T         # (N, N)  3x3 conv as matrix
    b_sp = params['b_sp'].reshape(1, 1)
    w_in = params['w_in']                                 # (3C, C) = [Wq; Wk; Wv]
    wq = w_in[:C].reshape(n_heads, hd, C)                 # per-head projections
    wk = w_in[C:2 * C].reshape(n_heads, hd, C)
    wv = w_in[2 * C:].reshape(n_heads, hd, C)
    wo = jnp.stack([params['w_out'][:, h * hd:(h + 1) * hd]
                    for h in range(n_heads)], axis=0)     # (n_heads, C, hd)
    w2 = params['w2']
    b2 = params['b2'].reshape(C, 1)
    a = params['a'].reshape(1, 2)

    full2 = lambda shape: pl.BlockSpec(shape, lambda b: (0, 0))
    full3 = lambda shape: pl.BlockSpec(shape, lambda b: (0, 0, 0))

    comp = pl.pallas_call(
        val_fused_kernel,
        grid=(B,),
        out_shape=jax.ShapeDtypeStruct((B, C, N), f32),
        in_specs=[
            pl.BlockSpec((None, C, N), lambda b: (b, 0, 0)),   # img  (per-batch block)
            pl.BlockSpec((None, 1, D), lambda b: (b, 0, 0)),   # text (per-batch block)
            full2((C, C)),                                     # w1i
            full2((C, D)),                                     # w1t
            full2((C, 1)),                                     # b1
            full2((C, C)),                                     # w_ch
            full2((C, 1)),                                     # b_ch
            full2((N, N)),                                     # spT
            full2((1, 1)),                                     # b_sp
            full3((n_heads, hd, C)),                           # wq
            full3((n_heads, hd, C)),                           # wk
            full3((n_heads, hd, C)),                           # wv
            full3((n_heads, C, hd)),                           # wo
            full2((C, C)),                                     # w2
            full2((C, 1)),                                     # b2
            full2((1, 2)),                                     # a
        ],
        out_specs=pl.BlockSpec((None, C, N), lambda b: (b, 0, 0)),
        compiler_params=pltpu.CompilerParams(
            dimension_semantics=("parallel",)),
    )(img, text3, w1i, w1t, b1, w_ch, b_ch, spT, b_sp,
      wq, wk, wv, wo, w2, b2, a)

    return comp.reshape(B, C, H, W)                        # free


# ---------------------------------------------------------------------------
# Pure-JAX reference mirroring the PyTorch module (NCHW), for verification
# ---------------------------------------------------------------------------
def val_reference(img_nchw, text, params, n_heads=2):
    B, C, H, W = img_nchw.shape
    D = text.shape[1]
    hd = C // n_heads
    hp = jax.lax.Precision.HIGHEST
    t = jnp.broadcast_to(text[:, :, None, None], (B, D, H, W))
    x = jnp.concatenate([img_nchw, t], axis=1)
    v1 = jnp.einsum('bihw,oi->bohw', x, params['w1'], precision=hp) \
        + params['b1'][None, :, None, None]
    gch = v1.mean(axis=(2, 3))
    att_ch = jnp.einsum('bi,oi->bo', gch, params['w_ch'], precision=hp) + params['b_ch']
    gsp = v1.mean(axis=1)
    pad = jnp.pad(gsp, ((0, 0), (1, 1), (1, 1)))
    att_sp = params['b_sp'][0] * jnp.ones((B, H, W), jnp.float32)
    for i in range(3):
        for j in range(3):
            att_sp = att_sp + params['w_sp'][i, j] * pad[:, i:i + H, j:j + W]
    joint = jax.nn.sigmoid(att_ch)[:, :, None, None] * jax.nn.sigmoid(att_sp)[:, None, :, :]

    xb = v1.reshape(B, C, H * W).transpose(0, 2, 1)        # (B, N, C)
    w_in, w_out = params['w_in'], params['w_out']
    q = jnp.einsum('bnc,oc->bno', xb, w_in[:C], precision=hp) / math.sqrt(hd)
    k = jnp.einsum('bnc,oc->bno', xb, w_in[C:2 * C], precision=hp)
    v = jnp.einsum('bnc,oc->bno', xb, w_in[2 * C:], precision=hp)
    heads = []
    for h in range(n_heads):
        qh = q[..., h * hd:(h + 1) * hd]
        kh = k[..., h * hd:(h + 1) * hd]
        vh = v[..., h * hd:(h + 1) * hd]
        s = jnp.einsum('bnd,bmd->bnm', qh, kh, precision=hp)
        p = jax.nn.softmax(s, axis=-1)
        heads.append(jnp.einsum('bnm,bmd->bnd', p, vh, precision=hp))
    sa = jnp.einsum('bnc,oc->bno', jnp.concatenate(heads, -1), w_out, precision=hp)
    sa_nchw = sa.transpose(0, 2, 1).reshape(B, C, H, W)
    sa2 = jnp.einsum('bihw,oi->bohw', sa_nchw, params['w2'], precision=hp) \
        + params['b2'][None, :, None, None]
    return params['a'][0] * joint * img_nchw + params['a'][1] * sa2


def init_params(key, text_channel, img_channel):
    C, D = img_channel, text_channel
    ks = jax.random.split(key, 10)
    s = 0.2
    return {
        'w1': s * jax.random.normal(ks[0], (C, C + D), jnp.float32),    # conv1 weight
        'b1': s * jax.random.normal(ks[1], (C,), jnp.float32),
        'w_ch': s * jax.random.normal(ks[2], (C, C), jnp.float32),      # att_ch_conv
        'b_ch': s * jax.random.normal(ks[3], (C,), jnp.float32),
        'w_sp': s * jax.random.normal(ks[4], (3, 3), jnp.float32),      # att_sp_conv 3x3
        'b_sp': s * jax.random.normal(ks[5], (1,), jnp.float32),
        'w_in': s * jax.random.normal(ks[6], (3 * C, C), jnp.float32),  # MHA in_proj
        'w_out': s * jax.random.normal(ks[7], (C, C), jnp.float32),     # MHA out_proj
        'w2': s * jax.random.normal(ks[8], (C, C), jnp.float32),        # conv2
        'b2': s * jax.random.normal(ks[9], (C,), jnp.float32),
        # Module __init__ is [0., 1.]; use a "trained" value so the gate branch is
        # actually exercised by the numerical check below.
        'a': jnp.array([0.6, 0.8], jnp.float32),
    }


if __name__ == "__main__":
    B, C, D, H, W = 2, 8, 16, 8, 8   # img_channel=8, text_channel=16
    key = jax.random.PRNGKey(0)
    k1, k2, k3 = jax.random.split(key, 3)
    img_feat = jax.random.normal(k1, (B, C, H, W), jnp.float32)
    text_feat = jax.random.normal(k2, (B, D), jnp.float32)
    params = init_params(k3, D, C)

    comp = jax.jit(val_forward)(img_feat, text_feat, params)
    jax.block_until_ready(comp)

    comp_ref = val_reference(img_feat, text_feat, params)
    assert comp.shape == (B, C, H, W)
    assert jnp.allclose(comp, comp_ref, rtol=1e-2, atol=1e-2), "composite mismatch"
    print("KERNEL_OK")
</pallas_src>

<mosaic_0001>
module attributes {stable_mosaic.version = 11 : i64} {
  func.func @val_fused_kernel(%arg0: i32, %arg1: memref<1x8x64xf32, #tpu.memory_space<vmem>>, %arg2: memref<1x1x16xf32, #tpu.memory_space<vmem>>, %arg3: memref<8x8xf32, #tpu.memory_space<vmem>>, %arg4: memref<8x16xf32, #tpu.memory_space<vmem>>, %arg5: memref<8x1xf32, #tpu.memory_space<vmem>>, %arg6: memref<8x8xf32, #tpu.memory_space<vmem>>, %arg7: memref<8x1xf32, #tpu.memory_space<vmem>>, %arg8: memref<64x64xf32, #tpu.memory_space<vmem>>, %arg9: memref<1x1xf32, #tpu.memory_space<vmem>>, %arg10: memref<2x4x8xf32, #tpu.memory_space<vmem>>, %arg11: memref<2x4x8xf32, #tpu.memory_space<vmem>>, %arg12: memref<2x4x8xf32, #tpu.memory_space<vmem>>, %arg13: memref<2x8x4xf32, #tpu.memory_space<vmem>>, %arg14: memref<8x8xf32, #tpu.memory_space<vmem>>, %arg15: memref<8x1xf32, #tpu.memory_space<vmem>>, %arg16: memref<1x2xf32, #tpu.memory_space<vmem>>, %arg17: memref<1x8x64xf32, #tpu.memory_space<vmem>>) attributes {dimension_semantics = [#tpu.dimension_semantics<parallel>], iteration_bounds = array<i64: 2>, scalar_prefetch = 0 : i64, scratch_operands = 0 : i64, tpu.core_type = #tpu.core_type<tc>, window_params = [{transform_indices = @transform_0, window_bounds = array<i64: 1, 8, 64>}, {transform_indices = @transform_1, window_bounds = array<i64: 1, 1, 16>}, {pipeline_mode = #tpu.pipeline_mode<synchronous>, transform_indices = @transform_2, window_bounds = array<i64: 8, 8>}, {pipeline_mode = #tpu.pipeline_mode<synchronous>, transform_indices = @transform_3, window_bounds = array<i64: 8, 16>}, {pipeline_mode = #tpu.pipeline_mode<synchronous>, transform_indices = @transform_4, window_bounds = array<i64: 8, 1>}, {pipeline_mode = #tpu.pipeline_mode<synchronous>, transform_indices = @transform_5, window_bounds = array<i64: 8, 8>}, {pipeline_mode = #tpu.pipeline_mode<synchronous>, transform_indices = @transform_6, window_bounds = array<i64: 8, 1>}, {pipeline_mode = #tpu.pipeline_mode<synchronous>, transform_indices = @transform_7, window_bounds = array<i64: 64, 64>}, {pipeline_mode = #tpu.pipeline_mode<synchronous>, transform_indices = @transform_8, window_bounds = array<i64: 1, 1>}, {pipeline_mode = #tpu.pipeline_mode<synchronous>, transform_indices = @transform_9, window_bounds = array<i64: 2, 4, 8>}, {pipeline_mode = #tpu.pipeline_mode<synchronous>, transform_indices = @transform_10, window_bounds = array<i64: 2, 4, 8>}, {pipeline_mode = #tpu.pipeline_mode<synchronous>, transform_indices = @transform_11, window_bounds = array<i64: 2, 4, 8>}, {pipeline_mode = #tpu.pipeline_mode<synchronous>, transform_indices = @transform_12, window_bounds = array<i64: 2, 8, 4>}, {pipeline_mode = #tpu.pipeline_mode<synchronous>, transform_indices = @transform_13, window_bounds = array<i64: 8, 8>}, {pipeline_mode = #tpu.pipeline_mode<synchronous>, transform_indices = @transform_14, window_bounds = array<i64: 8, 1>}, {pipeline_mode = #tpu.pipeline_mode<synchronous>, transform_indices = @transform_15, window_bounds = array<i64: 1, 2>}, {transform_indices = @transform_16, window_bounds = array<i64: 1, 8, 64>}]} {
    %c0 = arith.constant 0 : index
    %c0_0 = arith.constant 0 : index
    %c0_1 = arith.constant 0 : index
    %0 = vector.load %arg1[%c0, %c0_0, %c0_1] : memref<1x8x64xf32, #tpu.memory_space<vmem>>, vector<1x8x64xf32>
    %1 = vector.shape_cast %0 : vector<1x8x64xf32> to vector<8x64xf32>
    %c0_2 = arith.constant 0 : index
    %c0_3 = arith.constant 0 : index
    %2 = vector.load %arg3[%c0_2, %c0_3] : memref<8x8xf32, #tpu.memory_space<vmem>>, vector<8x8xf32>
    %cst = arith.constant dense<0.000000e+00> : vector<8x64xf32>
    %3 = tpu.matmul %2, %1, %cst {dimension_numbers = #tpu.dot_dimension_numbers<[1], [0], [0], [1], [0, 0, 1, 1], [], []>} : vector<8x8xf32>, vector<8x64xf32>, vector<8x64xf32> -> vector<8x64xf32>
    %c0_4 = arith.constant 0 : index
    %c0_5 = arith.constant 0 : index
    %4 = vector.load %arg4[%c0_4, %c0_5] : memref<8x16xf32, #tpu.memory_space<vmem>>, vector<8x16xf32>
    %c0_6 = arith.constant 0 : index
    %c0_7 = arith.constant 0 : index
    %c0_8 = arith.constant 0 : index
    %5 = vector.load %arg2[%c0_6, %c0_7, %c0_8] : memref<1x1x16xf32, #tpu.memory_space<vmem>>, vector<1x1x16xf32>
    %6 = vector.shape_cast %5 : vector<1x1x16xf32> to vector<1x16xf32>
    %7 = vector.broadcast %6 : vector<1x16xf32> to vector<8x16xf32>
    %8 = arith.mulf %4, %7 : vector<8x16xf32>
    %cst_9 = arith.constant dense<0.000000e+00> : vector<8xf32>
    %9 = vector.multi_reduction <add>, %8, %cst_9 [1] : vector<8x16xf32> to vector<8xf32>
    %10 = vector.shape_cast %9 : vector<8xf32> to vector<8x1xf32>
    %11 = vector.broadcast %10 : vector<8x1xf32> to vector<8x64xf32>
    %12 = arith.addf %3, %11 : vector<8x64xf32>
    %c0_10 = arith.constant 0 : index
    %c0_11 = arith.constant 0 : index
    %13 = vector.load %arg5[%c0_10, %c0_11] : memref<8x1xf32, #tpu.memory_space<vmem>>, vector<8x1xf32>
    %14 = vector.broadcast %13 : vector<8x1xf32> to vector<8x64xf32>
    %15 = arith.addf %12, %14 : vector<8x64xf32>
    %16 = tpu.iota {dimensions = array<i32: 0>} : vector<64x64xi32>
    %17 = tpu.iota {dimensions = array<i32: 1>} : vector<64x64xi32>
    %18 = arith.cmpi eq, %16, %17 : vector<64x64xi32>
    %19 = arith.extui %18 : vector<64x64xi1> to vector<64x64xi32>
    %20 = arith.sitofp %19 : vector<64x64xi32> to vector<64x64xf32>
    "tpu.trace_start"() <{level = 10 : i32, message = "nm,cm->nc"}> : () -> ()
    %cst_12 = arith.constant dense<0.000000e+00> : vector<64x8xf32>
    %21 = tpu.matmul %20, %15, %cst_12 {dimension_numbers = #tpu.dot_dimension_numbers<[1], [1], [0], [0], [0, 0, 1, 0], [], []>} : vector<64x64xf32>, vector<8x64xf32>, vector<64x8xf32> -> vector<64x8xf32>
    "tpu.trace_stop"() : () -> ()
    %cst_13 = arith.constant dense<0.000000e+00> : vector<8xf32>
    %22 = vector.multi_reduction <add>, %21, %cst_13 [0] : vector<64x8xf32> to vector<8xf32>
    %23 = vector.shape_cast %22 : vector<8xf32> to vector<1x8xf32>
    %cst_14 = arith.constant 6.400000e+01 : f32
    %24 = vector.broadcast %cst_14 : f32 to vector<1x8xf32>
    %25 = arith.divf %23, %24 : vector<1x8xf32>
    %c0_15 = arith.constant 0 : index
    %c0_16 = arith.constant 0 : index
    %26 = vector.load %arg6[%c0_15, %c0_16] : memref<8x8xf32, #tpu.memory_space<vmem>>, vector<8x8xf32>
    %27 = vector.broadcast %25 : vector<1x8xf32> to vector<8x8xf32>
    %28 = arith.mulf %26, %27 : vector<8x8xf32>
    %cst_17 = arith.constant dense<0.000000e+00> : vector<8xf32>
    %29 = vector.multi_reduction <add>, %28, %cst_17 [1] : vector<8x8xf32> to vector<8xf32>
    %30 = vector.shape_cast %29 : vector<8xf32> to vector<8x1xf32>
    %c0_18 = arith.constant 0 : index
    %c0_19 = arith.constant 0 : index
    %31 = vector.load %arg7[%c0_18, %c0_19] : memref<8x1xf32, #tpu.memory_space<vmem>>, vector<8x1xf32>
    %32 = arith.addf %30, %31 : vector<8x1xf32>
    %33 = arith.negf %32 : vector<8x1xf32>
    %34 = math.exp %33 : vector<8x1xf32>
    %cst_20 = arith.constant 1.000000e+00 : f32
    %35 = vector.broadcast %cst_20 : f32 to vector<8x1xf32>
    %36 = arith.addf %35, %34 : vector<8x1xf32>
    %37 = arith.divf %35, %36 : vector<8x1xf32>
    %cst_21 = arith.constant dense<0.000000e+00> : vector<64xf32>
    %38 = vector.multi_reduction <add>, %21, %cst_21 [1] : vector<64x8xf32> to vector<64xf32>
    %39 = vector.shape_cast %38 : vector<64xf32> to vector<64x1xf32>
    %cst_22 = arith.constant 8.000000e+00 : f32
    %40 = vector.broadcast %cst_22 : f32 to vector<64x1xf32>
    %41 = arith.divf %39, %40 : vector<64x1xf32>
    %c0_23 = arith.constant 0 : index
    %c0_24 = arith.constant 0 : index
    %42 = vector.load %arg8[%c0_23, %c0_24] : memref<64x64xf32, #tpu.memory_space<vmem>>, vector<64x64xf32>
    %43 = vector.broadcast %41 : vector<64x1xf32> to vector<64x64xf32>
    %44 = arith.mulf %42, %43 : vector<64x64xf32>
    %cst_25 = arith.constant dense<0.000000e+00> : vector<64xf32>
    %45 = vector.multi_reduction <add>, %44, %cst_25 [0] : vector<64x64xf32> to vector<64xf32>
    %46 = vector.shape_cast %45 : vector<64xf32> to vector<1x64xf32>
    %c0_26 = arith.constant 0 : index
    %c0_27 = arith.constant 0 : index
    %47 = vector.load %arg9[%c0_26, %c0_27] : memref<1x1xf32, #tpu.memory_space<vmem>>, vector<1x1xf32>
    %48 = vector.broadcast %47 : vector<1x1xf32> to vector<1x64xf32>
    %49 = arith.addf %46, %48 : vector<1x64xf32>
    %50 = arith.negf %49 : vector<1x64xf32>
    %51 = math.exp %50 : vector<1x64xf32>
    %cst_28 = arith.constant 1.000000e+00 : f32
    %52 = vector.broadcast %cst_28 : f32 to vector<1x64xf32>
    %53 = arith.addf %52, %51 : vector<1x64xf32>
    %54 = arith.divf %52, %53 : vector<1x64xf32>
    %cst_29 = arith.constant 0.000000e+00 : f32
    %55 = vector.broadcast %cst_29 : f32 to vector<8x64xf32>
    %c0_30 = arith.constant 0 : index
    %c0_31 = arith.constant 0 : index
    %c0_32 = arith.constant 0 : index
    %56 = vector.load %arg10[%c0_30, %c0_31, %c0_32] : memref<2x4x8xf32, #tpu.memory_space<vmem>>, vector<1x4x8xf32>
    %57 = vector.shape_cast %56 : vector<1x4x8xf32> to vector<4x8xf32>
    "tpu.trace_start"() <{level = 10 : i32, message = "nc,dc->nd"}> : () -> ()
    %cst_33 = arith.constant dense<0.000000e+00> : vector<64x4xf32>
    %58 = tpu.matmul %21, %57, %cst_33 {dimension_numbers = #tpu.dot_dimension_numbers<[1], [1], [0], [0], [0, 0, 1, 0], [], []>} : vector<64x8xf32>, vector<4x8xf32>, vector<64x4xf32> -> vector<64x4xf32>
    "tpu.trace_stop"() : () -> ()
    %cst_34 = arith.constant 5.000000e-01 : f32
    %59 = vector.broadcast %cst_34 : f32 to vector<64x4xf32>
    %60 = arith.mulf %58, %59 : vector<64x4xf32>
    %c0_35 = arith.constant 0 : index
    %c0_36 = arith.constant 0 : index
    %c0_37 = arith.constant 0 : index
    %61 = vector.load %arg11[%c0_35, %c0_36, %c0_37] : memref<2x4x8xf32, #tpu.memory_space<vmem>>, vector<1x4x8xf32>
    %62 = vector.shape_cast %61 : vector<1x4x8xf32> to vector<4x8xf32>
    "tpu.trace_start"() <{level = 10 : i32, message = "nc,dc->nd"}> : () -> ()
    %cst_38 = arith.constant dense<0.000000e+00> : vector<64x4xf32>
    %63 = tpu.matmul %21, %62, %cst_38 {dimension_numbers = #tpu.dot_dimension_numbers<[1], [1], [0], [0], [0, 0, 1, 0], [], []>} : vector<64x8xf32>, vector<4x8xf32>, vector<64x4xf32> -> vector<64x4xf32>
    "tpu.trace_stop"() : () -> ()
    %c0_39 = arith.constant 0 : index
    %c0_40 = arith.constant 0 : index
    %c0_41 = arith.constant 0 : index
    %64 = vector.load %arg12[%c0_39, %c0_40, %c0_41] : memref<2x4x8xf32, #tpu.memory_space<vmem>>, vector<1x4x8xf32>
    %65 = vector.shape_cast %64 : vector<1x4x8xf32> to vector<4x8xf32>
    "tpu.trace_start"() <{level = 10 : i32, message = "nc,dc->nd"}> : () -> ()
    %cst_42 = arith.constant dense<0.000000e+00> : vector<64x4xf32>
    %66 = tpu.matmul %21, %65, %cst_42 {dimension_numbers = #tpu.dot_dimension_numbers<[1], [1], [0], [0], [0, 0, 1, 0], [], []>} : vector<64x8xf32>, vector<4x8xf32>, vector<64x4xf32> -> vector<64x4xf32>
    "tpu.trace_stop"() : () -> ()
    "tpu.trace_start"() <{level = 10 : i32, message = "nd,md->nm"}> : () -> ()
    %cst_43 = arith.constant dense<0.000000e+00> : vector<64x64xf32>
    %67 = tpu.matmul %60, %63, %cst_43 {dimension_numbers = #tpu.dot_dimension_numbers<[1], [1], [0], [0], [0, 0, 1, 0], [], []>} : vector<64x4xf32>, vector<64x4xf32>, vector<64x64xf32> -> vector<64x64xf32>
    "tpu.trace_stop"() : () -> ()
    %cst_44 = arith.constant dense<0xFF800000> : vector<64xf32>
    %68 = vector.multi_reduction <maximumf>, %67, %cst_44 [1] : vector<64x64xf32> to vector<64xf32>
    %69 = vector.shape_cast %68 : vector<64xf32> to vector<64x1xf32>
    %70 = vector.broadcast %69 : vector<64x1xf32> to vector<64x64xf32>
    %71 = arith.subf %67, %70 : vector<64x64xf32>
    %72 = math.exp %71 : vector<64x64xf32>
    %cst_45 = arith.constant dense<0.000000e+00> : vector<64xf32>
    %73 = vector.multi_reduction <add>, %72, %cst_45 [1] : vector<64x64xf32> to vector<64xf32>
    %74 = vector.shape_cast %73 : vector<64xf32> to vector<64x1xf32>
    %75 = tpu.reciprocal %74 {approx = true} : vector<64x1xf32> -> vector<64x1xf32>
    %76 = vector.broadcast %75 : vector<64x1xf32> to vector<64x64xf32>
    %77 = arith.mulf %72, %76 : vector<64x64xf32>
    %cst_46 = arith.constant dense<0.000000e+00> : vector<64x4xf32>
    %78 = tpu.matmul %77, %66, %cst_46 {dimension_numbers = #tpu.dot_dimension_numbers<[1], [0], [0], [1], [0, 0, 1, 1], [], []>} : vector<64x64xf32>, vector<64x4xf32>, vector<64x4xf32> -> vector<64x4xf32>
    %c0_47 = arith.constant 0 : index
    %c0_48 = arith.constant 0 : index
    %c0_49 = arith.constant 0 : index
    %79 = vector.load %arg13[%c0_47, %c0_48, %c0_49] : memref<2x8x4xf32, #tpu.memory_space<vmem>>, vector<1x8x4xf32>
    %80 = vector.shape_cast %79 : vector<1x8x4xf32> to vector<8x4xf32>
    "tpu.trace_start"() <{level = 10 : i32, message = "od,nd->on"}> : () -> ()
    %cst_50 = arith.constant dense<0.000000e+00> : vector<8x64xf32>
    %81 = tpu.matmul %80, %78, %cst_50 {dimension_numbers = #tpu.dot_dimension_numbers<[1], [1], [0], [0], [0, 0, 1, 0], [], []>} : vector<8x4xf32>, vector<64x4xf32>, vector<8x64xf32> -> vector<8x64xf32>
    "tpu.trace_stop"() : () -> ()
    %82 = arith.addf %55, %81 : vector<8x64xf32>
    %c1 = arith.constant 1 : index
    %c0_51 = arith.constant 0 : index
    %c0_52 = arith.constant 0 : index
    %83 = vector.load %arg10[%c1, %c0_51, %c0_52] : memref<2x4x8xf32, #tpu.memory_space<vmem>>, vector<1x4x8xf32>
    %84 = vector.shape_cast %83 : vector<1x4x8xf32> to vector<4x8xf32>
    "tpu.trace_start"() <{level = 10 : i32, message = "nc,dc->nd"}> : () -> ()
    %cst_53 = arith.constant dense<0.000000e+00> : vector<64x4xf32>
    %85 = tpu.matmul %21, %84, %cst_53 {dimension_numbers = #tpu.dot_dimension_numbers<[1], [1], [0], [0], [0, 0, 1, 0], [], []>} : vector<64x8xf32>, vector<4x8xf32>, vector<64x4xf32> -> vector<64x4xf32>
    "tpu.trace_stop"() : () -> ()
    %cst_54 = arith.constant 5.000000e-01 : f32
    %86 = vector.broadcast %cst_54 : f32 to vector<64x4xf32>
    %87 = arith.mulf %85, %86 : vector<64x4xf32>
    %c1_55 = arith.constant 1 : index
    %c0_56 = arith.constant 0 : index
    %c0_57 = arith.constant 0 : index
    %88 = vector.load %arg11[%c1_55, %c0_56, %c0_57] : memref<2x4x8xf32, #tpu.memory_space<vmem>>, vector<1x4x8xf32>
    %89 = vector.shape_cast %88 : vector<1x4x8xf32> to vector<4x8xf32>
    "tpu.trace_start"() <{level = 10 : i32, message = "nc,dc->nd"}> : () -> ()
    %cst_58 = arith.constant dense<0.000000e+00> : vector<64x4xf32>
    %90 = tpu.matmul %21, %89, %cst_58 {dimension_numbers = #tpu.dot_dimension_numbers<[1], [1], [0], [0], [0, 0, 1, 0], [], []>} : vector<64x8xf32>, vector<4x8xf32>, vector<64x4xf32> -> vector<64x4xf32>
    "tpu.trace_stop"() : () -> ()
    %c1_59 = arith.constant 1 : index
    %c0_60 = arith.constant 0 : index
    %c0_61 = arith.constant 0 : index
    %91 = vector.load %arg12[%c1_59, %c0_60, %c0_61] : memref<2x4x8xf32, #tpu.memory_space<vmem>>, vector<1x4x8xf32>
    %92 = vector.shape_cast %91 : vector<1x4x8xf32> to vector<4x8xf32>
    "tpu.trace_start"() <{level = 10 : i32, message = "nc,dc->nd"}> : () -> ()
    %cst_62 = arith.constant dense<0.000000e+00> : vector<64x4xf32>
    %93 = tpu.matmul %21, %92, %cst_62 {dimension_numbers = #tpu.dot_dimension_numbers<[1], [1], [0], [0], [0, 0, 1, 0], [], []>} : vector<64x8xf32>, vector<4x8xf32>, vector<64x4xf32> -> vector<64x4xf32>
    "tpu.trace_stop"() : () -> ()
    "tpu.trace_start"() <{level = 10 : i32, message = "nd,md->nm"}> : () -> ()
    %cst_63 = arith.constant dense<0.000000e+00> : vector<64x64xf32>
    %94 = tpu.matmul %87, %90, %cst_63 {dimension_numbers = #tpu.dot_dimension_numbers<[1], [1], [0], [0], [0, 0, 1, 0], [], []>} : vector<64x4xf32>, vector<64x4xf32>, vector<64x64xf32> -> vector<64x64xf32>
    "tpu.trace_stop"() : () -> ()
    %cst_64 = arith.constant dense<0xFF800000> : vector<64xf32>
    %95 = vector.multi_reduction <maximumf>, %94, %cst_64 [1] : vector<64x64xf32> to vector<64xf32>
    %96 = vector.shape_cast %95 : vector<64xf32> to vector<64x1xf32>
    %97 = vector.broadcast %96 : vector<64x1xf32> to vector<64x64xf32>
    %98 = arith.subf %94, %97 : vector<64x64xf32>
    %99 = math.exp %98 : vector<64x64xf32>
    %cst_65 = arith.constant dense<0.000000e+00> : vector<64xf32>
    %100 = vector.multi_reduction <add>, %99, %cst_65 [1] : vector<64x64xf32> to vector<64xf32>
    %101 = vector.shape_cast %100 : vector<64xf32> to vector<64x1xf32>
    %102 = tpu.reciprocal %101 {approx = true} : vector<64x1xf32> -> vector<64x1xf32>
    %103 = vector.broadcast %102 : vector<64x1xf32> to vector<64x64xf32>
    %104 = arith.mulf %99, %103 : vector<64x64xf32>
    %cst_66 = arith.constant dense<0.000000e+00> : vector<64x4xf32>
    %105 = tpu.matmul %104, %93, %cst_66 {dimension_numbers = #tpu.dot_dimension_numbers<[1], [0], [0], [1], [0, 0, 1, 1], [], []>} : vector<64x64xf32>, vector<64x4xf32>, vector<64x4xf32> -> vector<64x4xf32>
    %c1_67 = arith.constant 1 : index
    %c0_68 = arith.constant 0 : index
    %c0_69 = arith.constant 0 : index
    %106 = vector.load %arg13[%c1_67, %c0_68, %c0_69] : memref<2x8x4xf32, #tpu.memory_space<vmem>>, vector<1x8x4xf32>
    %107 = vector.shape_cast %106 : vector<1x8x4xf32> to vector<8x4xf32>
    "tpu.trace_start"() <{level = 10 : i32, message = "od,nd->on"}> : () -> ()
    %cst_70 = arith.constant dense<0.000000e+00> : vector<8x64xf32>
    %108 = tpu.matmul %107, %105, %cst_70 {dimension_numbers = #tpu.dot_dimension_numbers<[1], [1], [0], [0], [0, 0, 1, 0], [], []>} : vector<8x4xf32>, vector<64x4xf32>, vector<8x64xf32> -> vector<8x64xf32>
    "tpu.trace_stop"() : () -> ()
    %109 = arith.addf %82, %108 : vector<8x64xf32>
    %c0_71 = arith.constant 0 : index
    %c0_72 = arith.constant 0 : index
    %110 = vector.load %arg14[%c0_71, %c0_72] : memref<8x8xf32, #tpu.memory_space<vmem>>, vector<8x8xf32>
    %cst_73 = arith.constant dense<0.000000e+00> : vector<8x64xf32>
    %111 = tpu.matmul %110, %109, %cst_73 {dimension_numbers = #tpu.dot_dimension_numbers<[1], [0], [0], [1], [0, 0, 1, 1], [], []>} : vector<8x8xf32>, vector<8x64xf32>, vector<8x64xf32> -> vector<8x64xf32>
    %c0_74 = arith.constant 0 : index
    %c0_75 = arith.constant 0 : index
    %112 = vector.load %arg15[%c0_74, %c0_75] : memref<8x1xf32, #tpu.memory_space<vmem>>, vector<8x1xf32>
    %113 = vector.broadcast %112 : vector<8x1xf32> to vector<8x64xf32>
    %114 = arith.addf %111, %113 : vector<8x64xf32>
    %115 = vector.broadcast %37 : vector<8x1xf32> to vector<8x64xf32>
    %116 = vector.broadcast %54 : vector<1x64xf32> to vector<8x64xf32>
    %117 = arith.mulf %115, %116 : vector<8x64xf32>
    %c0_76 = arith.constant 0 : index
    %c0_77 = arith.constant 0 : index
    %118 = vector.load %arg16[%c0_76, %c0_77] : memref<1x2xf32, #tpu.memory_space<vmem>>, vector<1x1xf32>
    %c0_78 = arith.constant 0 : index
    %c1_79 = arith.constant 1 : index
    %119 = vector.load %arg16[%c0_78, %c1_79] : memref<1x2xf32, #tpu.memory_space<vmem>>, vector<1x1xf32>
    %120 = vector.broadcast %118 : vector<1x1xf32> to vector<8x64xf32>
    %121 = arith.mulf %120, %117 : vector<8x64xf32>
    %122 = arith.mulf %121, %1 : vector<8x64xf32>
    %123 = vector.broadcast %119 : vector<1x1xf32> to vector<8x64xf32>
    %124 = arith.mulf %123, %114 : vector<8x64xf32>
    %125 = arith.addf %122, %124 : vector<8x64xf32>
    %c0_80 = arith.constant 0 : index
    %c0_81 = arith.constant 0 : index
    %c0_82 = arith.constant 0 : index
    %126 = vector.load %arg17[%c0_80, %c0_81, %c0_82] : memref<1x8x64xf32, #tpu.memory_space<vmem>>, vector<1x8x64xf32>
    %127 = vector.shape_cast %126 : vector<1x8x64xf32> to vector<8x64xf32>
    %128 = vector.shape_cast %125 : vector<8x64xf32> to vector<1x8x64xf32>
    tpu.vector_store %arg17[%c0_80, %c0_81, %c0_82], %128 {strides = array<i32>} : memref<1x8x64xf32, #tpu.memory_space<vmem>>, vector<1x8x64xf32>,
    return
  }
  func.func @transform_0(%arg0: i32) -> (i32, i32, i32) {
    %c0_i32 = arith.constant 0 : i32
    %c0_i32_0 = arith.constant 0 : i32
    %c0_i32_1 = arith.constant 0 : i32
    return %arg0, %c0_i32, %c0_i32_0 : i32, i32, i32
  }
  func.func @transform_1(%arg0: i32) -> (i32, i32, i32) {
    %c0_i32 = arith.constant 0 : i32
    %c0_i32_0 = arith.constant 0 : i32
    %c0_i32_1 = arith.constant 0 : i32
    return %arg0, %c0_i32, %c0_i32_0 : i32, i32, i32
  }
  func.func @transform_2(%arg0: i32) -> (i32, i32) {
    %c0_i32 = arith.constant 0 : i32
    %c0_i32_0 = arith.constant 0 : i32
    %c0_i32_1 = arith.constant 0 : i32
    return %c0_i32, %c0_i32_0 : i32, i32
  }
  func.func @transform_3(%arg0: i32) -> (i32, i32) {
    %c0_i32 = arith.constant 0 : i32
    %c0_i32_0 = arith.constant 0 : i32
    %c0_i32_1 = arith.constant 0 : i32
    return %c0_i32, %c0_i32_0 : i32, i32
  }
  func.func @transform_4(%arg0: i32) -> (i32, i32) {
    %c0_i32 = arith.constant 0 : i32
    %c0_i32_0 = arith.constant 0 : i32
    %c0_i32_1 = arith.constant 0 : i32
    return %c0_i32, %c0_i32_0 : i32, i32
  }
  func.func @transform_5(%arg0: i32) -> (i32, i32) {
    %c0_i32 = arith.constant 0 : i32
    %c0_i32_0 = arith.constant 0 : i32
    %c0_i32_1 = arith.constant 0 : i32
    return %c0_i32, %c0_i32_0 : i32, i32
  }
  func.func @transform_6(%arg0: i32) -> (i32, i32) {
    %c0_i32 = arith.constant 0 : i32
    %c0_i32_0 = arith.constant 0 : i32
    %c0_i32_1 = arith.constant 0 : i32
    return %c0_i32, %c0_i32_0 : i32, i32
  }
  func.func @transform_7(%arg0: i32) -> (i32, i32) {
    %c0_i32 = arith.constant 0 : i32
    %c0_i32_0 = arith.constant 0 : i32
    %c0_i32_1 = arith.constant 0 : i32
    return %c0_i32, %c0_i32_0 : i32, i32
  }
  func.func @transform_8(%arg0: i32) -> (i32, i32) {
    %c0_i32 = arith.constant 0 : i32
    %c0_i32_0 = arith.constant 0 : i32
    %c0_i32_1 = arith.constant 0 : i32
    return %c0_i32, %c0_i32_0 : i32, i32
  }
  func.func @transform_9(%arg0: i32) -> (i32, i32, i32) {
    %c0_i32 = arith.constant 0 : i32
    %c0_i32_0 = arith.constant 0 : i32
    %c0_i32_1 = arith.constant 0 : i32
    %c0_i32_2 = arith.constant 0 : i32
    return %c0_i32, %c0_i32_0, %c0_i32_1 : i32, i32, i32
  }
  func.func @transform_10(%arg0: i32) -> (i32, i32, i32) {
    %c0_i32 = arith.constant 0 : i32
    %c0_i32_0 = arith.constant 0 : i32
    %c0_i32_1 = arith.constant 0 : i32
    %c0_i32_2 = arith.constant 0 : i32
    return %c0_i32, %c0_i32_0, %c0_i32_1 : i32, i32, i32
  }
  func.func @transform_11(%arg0: i32) -> (i32, i32, i32) {
    %c0_i32 = arith.constant 0 : i32
    %c0_i32_0 = arith.constant 0 : i32
    %c0_i32_1 = arith.constant 0 : i32
    %c0_i32_2 = arith.constant 0 : i32
    return %c0_i32, %c0_i32_0, %c0_i32_1 : i32, i32, i32
  }
  func.func @transform_12(%arg0: i32) -> (i32, i32, i32) {
    %c0_i32 = arith.constant 0 : i32
    %c0_i32_0 = arith.constant 0 : i32
    %c0_i32_1 = arith.constant 0 : i32
    %c0_i32_2 = arith.constant 0 : i32
    return %c0_i32, %c0_i32_0, %c0_i32_1 : i32, i32, i32
  }
  func.func @transform_13(%arg0: i32) -> (i32, i32) {
    %c0_i32 = arith.constant 0 : i32
    %c0_i32_0 = arith.constant 0 : i32
    %c0_i32_1 = arith.constant 0 : i32
    return %c0_i32, %c0_i32_0 : i32, i32
  }
  func.func @transform_14(%arg0: i32) -> (i32, i32) {
    %c0_i32 = arith.constant 0 : i32
    %c0_i32_0 = arith.constant 0 : i32
    %c0_i32_1 = arith.constant 0 : i32
    return %c0_i32, %c0_i32_0 : i32, i32
  }
  func.func @transform_15(%arg0: i32) -> (i32, i32) {
    %c0_i32 = arith.constant 0 : i32
    %c0_i32_0 = arith.constant 0 : i32
    %c0_i32_1 = arith.constant 0 : i32
    return %c0_i32, %c0_i32_0 : i32, i32
  }
  func.func @transform_16(%arg0: i32) -> (i32, i32, i32) {
    %c0_i32 = arith.constant 0 : i32
    %c0_i32_0 = arith.constant 0 : i32
    %c0_i32_1 = arith.constant 0 : i32
    return %arg0, %c0_i32, %c0_i32_0 : i32, i32, i32
  }
}

</mosaic_0001>

<llo_original>
// kernel: val_forward.1
$region0: #{val_forward.1}
  #allocation0 [shape = 'u32[]', space=smem, size = 0x4, offset = 0x4, fixed_abs, tag = 'smem constant byte address 0x4 - core index']
  #allocation1 [shape = 'u32[144,128]{1,0:T(1,128)}', space=vmem, size = 0x12000, scoped, tag = 'internal scratch']
  #allocation2 [shape = 'f32[1,1]{1,0:T(1,128)S(1)}', space=vmem, size = 0x200, scoped, tag = 'scoped memory for val_forward.1']
  %s0 = inlined_call_operand.vmem [shape: f32[2,8,64], index: 0, kind: input, shape index: {}]
  %s1 = inlined_call_operand.vmem [shape: f32[2,1,16], index: 1, kind: input, shape index: {}]
  %s2 = inlined_call_operand.vmem [shape: f32[8,8], index: 2, kind: input, shape index: {}]
  %s3 = inlined_call_operand.vmem [shape: f32[8,16], index: 3, kind: input, shape index: {}]
  %s4 = inlined_call_operand.vmem [shape: f32[8,1], index: 4, kind: input, shape index: {}]
  %s5 = inlined_call_operand.vmem [shape: f32[8,8], index: 5, kind: input, shape index: {}]
  %s6 = inlined_call_operand.vmem [shape: f32[8,1], index: 6, kind: input, shape index: {}]
  %s7 = inlined_call_operand.vmem [shape: f32[64,64], index: 7, kind: input, shape index: {}]
  %s8 = inlined_call_operand.<no memory space> [shape: f32[1,1], index: 8, kind: input, shape index: {}]
  %s9 = inlined_call_operand.vmem [shape: f32[2,4,8], index: 9, kind: input, shape index: {}]
  %s10 = inlined_call_operand.vmem [shape: f32[2,4,8], index: 10, kind: input, shape index: {}]
  %s11 = inlined_call_operand.vmem [shape: f32[2,4,8], index: 11, kind: input, shape index: {}]
  %s12 = inlined_call_operand.vmem [shape: f32[2,8,4], index: 12, kind: input, shape index: {}]
  %s13 = inlined_call_operand.vmem [shape: f32[8,8], index: 13, kind: input, shape index: {}]
  %s14 = inlined_call_operand.vmem [shape: f32[8,1], index: 14, kind: input, shape index: {}]
  %s15 = inlined_call_operand.vmem [shape: f32[1,2], index: 15, kind: input, shape index: {}]
  %s16 = inlined_call_operand.vmem [shape: f32[2,8,64], index: 16, kind: output, shape index: {}]
  %s17 = sld [smem:[#allocation0]]
  $region97: #{val_forward.1} parent=0
    _
  %s19 = ssub.s32 1, %s17
  %s20 = scalar_select 0, %s19, %s17
  %v21 = vstv %s8
  %22 = vst [vmem:[#allocation2] sm:$0x1] %v21
  loop: start=0, step=1, limit=4
  $region2: #{val_forward.1} parent=0 // loop_pre_header
    _
  $region3: #{val_forward.1} parent=0 // loop_header
    %s24 = sphi 0, %s28
    %p25 = scmp.ge.s32.totalorder %s24, 4
    %s34 = sphi 0, %s36
    %s37 = sphi 0, %s34
    %s38 = sphi 0, %s37
    %s54 = sphi 0, %s38
    %s60 = sphi 0, %s62
    %s63 = sphi 0, %s60
    %s64 = sphi 0, %s63
    %s80 = sphi 0, %s64
    %s84 = sphi 0, %s84
    %s86 = sphi 0, %s84
    %s87 = sphi 0, %s86
    %s101 = sphi 0, %s87
    %s105 = sphi 0, %s105
    %s107 = sphi 0, %s105
    %s108 = sphi 0, %s107
    %s122 = sphi 0, %s108
    %s126 = sphi 0, %s126
    %s128 = sphi 0, %s126
    %s129 = sphi 0, %s128
    %s143 = sphi 0, %s129
    %s147 = sphi 0, %s147
    %s149 = sphi 0, %s147
    %s150 = sphi 0, %s149
    %s164 = sphi 0, %s150
    %s168 = sphi 0, %s168
    %s170 = sphi 0, %s168
    %s171 = sphi 0, %s170
    %s185 = sphi 0, %s171
    %s189 = sphi 0, %s189
    %s191 = sphi 0, %s189
    %s192 = sphi 0, %s191
    %s206 = sphi 0, %s192
    %s210 = sphi 0, %s210
    %s212 = sphi 0, %s210
    %s213 = sphi 0, %s212
    %s227 = sphi 0, %s213
    %s231 = sphi 0, %s231
    %s233 = sphi 0, %s231
    %s234 = sphi 0, %s233
    %s248 = sphi 0, %s234
    %s252 = sphi 0, %s252
    %s254 = sphi 0, %s252
    %s255 = sphi 0, %s254
    %s269 = sphi 0, %s255
    %s273 = sphi 0, %s273
    %s275 = sphi 0, %s273
    %s276 = sphi 0, %s275
    %s290 = sphi 0, %s276
    %s294 = sphi 0, %s294
    %s296 = sphi 0, %s294
    %s297 = sphi 0, %s296
    %s311 = sphi 0, %s297
    %s315 = sphi 0, %s315
    %s317 = sphi 0, %s315
    %s318 = sphi 0, %s317
    %s332 = sphi 0, %s318
    %s336 = sphi 0, %s336
    %s338 = sphi 0, %s336
    %s339 = sphi 0, %s338
    %s353 = sphi 0, %s339
    %s357 = sphi 0, %s357
    %s359 = sphi 0, %s357
    %s360 = sphi 0, %s359
    %s374 = sphi 0, %s360
    %s380 = sphi 0, %s382
    %s383 = sphi 0, %s380
    %s384 = sphi 0, %s383
    %s400 = sphi 0, %s384
  $region4: #{val_forward.1} parent=0 // loop_header_branch
    %27 = sbr.rel (%p25) target = $region8
  $region5: #{val_forward.1} parent=0 // loop_body
    %s29 = ssub.s32 %s24, 1
    %s30 = ssub.s32 %s24, 2
    %s31 = sadd.s32 %s24, 1
    %s32 = ssub.s32 %s24, %s31
    %p33 = scmp.eq.s32.totalorder %s32, 0
    %s35 = sadd.s32 %s34, 1
    %s36 = scalar_select %p33, %s34, %s35
    %p39 = pneg %p33
    %p40 = scmp.eq.s32.totalorder %s24, 1
    %p41 = por %p39, %p40
    %p42 = scmp.ne.s32.totalorder %s34, %s37
    %p43 = scmp.eq.s32.totalorder %s24, 0
    %p44 = por %p42, %p43
    %p45 = scmp.ne.s32.totalorder %s34, %s37
    %p46 = scmp.eq.s32.totalorder %s29, 1
    %p47 = por %p45, %p46
    %p48 = scmp.ne.s32.totalorder %s37, %s38
    %p49 = scmp.eq.s32.totalorder %s29, 0
    %p50 = por %p48, %p49
    %p51 = scmp.ne.s32.totalorder %s37, %s38
    %p52 = scmp.eq.s32.totalorder %s30, 1
    %p53 = por %p51, %p52
    %p55 = scmp.ne.s32.totalorder %s38, %s54
    %p56 = scmp.eq.s32.totalorder %s30, 0
    %p57 = por %p55, %p56
    %s58 = ssub.s32 %s24, %s31
    %p59 = scmp.eq.s32.totalorder %s58, 0
    %s61 = sadd.s32 %s60, 1
    %s62 = scalar_select %p59, %s60, %s61
    %p65 = pneg %p59
    %p66 = scmp.eq.s32.totalorder %s24, 1
    %p67 = por %p65, %p66
    %p68 = scmp.ne.s32.totalorder %s60, %s63
    %p69 = scmp.eq.s32.totalorder %s24, 0
    %p70 = por %p68, %p69
    %p71 = scmp.ne.s32.totalorder %s60, %s63
    %p72 = scmp.eq.s32.totalorder %s29, 1
    %p73 = por %p71, %p72
    %p74 = scmp.ne.s32.totalorder %s63, %s64
    %p75 = scmp.eq.s32.totalorder %s29, 0
    %p76 = por %p74, %p75
    %p77 = scmp.ne.s32.totalorder %s63, %s64
    %p78 = scmp.eq.s32.totalorder %s30, 1
    %p79 = por %p77, %p78
    %p81 = scmp.ne.s32.totalorder %s64, %s80
    %p82 = scmp.eq.s32.totalorder %s30, 0
    %p83 = por %p81, %p82
    %s85 = sadd.s32 %s84, 1
    %p88 = scmp.eq.s32.totalorder %s24, 1
    %p89 = scmp.ne.s32.totalorder %s84, %s86
    %p90 = scmp.eq.s32.totalorder %s24, 0
    %p91 = por %p89, %p90
    %p92 = scmp.ne.s32.totalorder %s84, %s86
    %p93 = scmp.eq.s32.totalorder %s29, 1
    %p94 = por %p92, %p93
    %p95 = scmp.ne.s32.totalorder %s86, %s87
    %p96 = scmp.eq.s32.totalorder %s29, 0
    %p97 = por %p95, %p96
    %p98 = scmp.ne.s32.totalorder %s86, %s87
    %p99 = scmp.eq.s32.totalorder %s30, 1
    %p100 = por %p98, %p99
    %p102 = scmp.ne.s32.totalorder %s87, %s101
    %p103 = scmp.eq.s32.totalorder %s30, 0
    %p104 = por %p102, %p103
    %s106 = sadd.s32 %s105, 1
    %p109 = scmp.eq.s32.totalorder %s24, 1
    %p110 = scmp.ne.s32.totalorder %s105, %s107
    %p111 = scmp.eq.s32.totalorder %s24, 0
    %p112 = por %p110, %p111
    %p113 = scmp.ne.s32.totalorder %s105, %s107
    %p114 = scmp.eq.s32.totalorder %s29, 1
    %p115 = por %p113, %p114
    %p116 = scmp.ne.s32.totalorder %s107, %s108
    %p117 = scmp.eq.s32.totalorder %s29, 0
    %p118 = por %p116, %p117
    %p119 = scmp.ne.s32.totalorder %s107, %s108
    %p120 = scmp.eq.s32.totalorder %s30, 1
    %p121 = por %p119, %p120
    %p123 = scmp.ne.s32.totalorder %s108, %s122
    %p124 = scmp.eq.s32.totalorder %s30, 0
    %p125 = por %p123, %p124
    %s127 = sadd.s32 %s126, 1
    %p130 = scmp.eq.s32.totalorder %s24, 1
    %p131 = scmp.ne.s32.totalorder %s126, %s128
    %p132 = scmp.eq.s32.totalorder %s24, 0
    %p133 = por %p131, %p132
    %p134 = scmp.ne.s32.totalorder %s126, %s128
    %p135 = scmp.eq.s32.totalorder %s29, 1
    %p136 = por %p134, %p135
    %p137 = scmp.ne.s32.totalorder %s128, %s129
    %p138 = scmp.eq.s32.totalorder %s29, 0
    %p139 = por %p137, %p138
    %p140 = scmp.ne.s32.totalorder %s128, %s129
    %p141 = scmp.eq.s32.totalorder %s30, 1
    %p142 = por %p140, %p141
    %p144 = scmp.ne.s32.totalorder %s129, %s143
    %p145 = scmp.eq.s32.totalorder %s30, 0
    %p146 = por %p144, %p145
    %s148 = sadd.s32 %s147, 1
    %p151 = scmp.eq.s32.totalorder %s24, 1
    %p152 = scmp.ne.s32.totalorder %s147, %s149
    %p153 = scmp.eq.s32.totalorder %s24, 0
    %p154 = por %p152, %p153
    %p155 = scmp.ne.s32.totalorder %s147, %s149
    %p156 = scmp.eq.s32.totalorder %s29, 1
    %p157 = por %p155, %p156
    %p158 = scmp.ne.s32.totalorder %s149, %s150
    %p159 = scmp.eq.s32.totalorder %s29, 0
    %p160 = por %p158, %p159
    %p161 = scmp.ne.s32.totalorder %s149, %s150
    %p162 = scmp.eq.s32.totalorder %s30, 1
    %p163 = por %p161, %p162
    %p165 = scmp.ne.s32.totalorder %s150, %s164
    %p166 = scmp.eq.s32.totalorder %s30, 0
    %p167 = por %p165, %p166
    %s169 = sadd.s32 %s168, 1
    %p172 = scmp.eq.s32.totalorder %s24, 1
    %p173 = scmp.ne.s32.totalorder %s168, %s170
    %p174 = scmp.eq.s32.totalorder %s24, 0
    %p175 = por %p173, %p174
    %p176 = scmp.ne.s32.totalorder %s168, %s170
    %p177 = scmp.eq.s32.totalorder %s29, 1
    %p178 = por %p176, %p177
    %p179 = scmp.ne.s32.totalorder %s170, %s171
    %p180 = scmp.eq.s32.totalorder %s29, 0
    %p181 = por %p179, %p180
    %p182 = scmp.ne.s32.totalorder %s170, %s171
    %p183 = scmp.eq.s32.totalorder %s30, 1
    %p184 = por %p182, %p183
    %p186 = scmp.ne.s32.totalorder %s171, %s185
    %p187 = scmp.eq.s32.totalorder %s30, 0
    %p188 = por %p186, %p187
    %s190 = sadd.s32 %s189, 1
    %p193 = scmp.eq.s32.totalorder %s24, 1
    %p194 = scmp.ne.s32.totalorder %s189, %s191
    %p195 = scmp.eq.s32.totalorder %s24, 0
    %p196 = por %p194, %p195
    %p197 = scmp.ne.s32.totalorder %s189, %s191
    %p198 = scmp.eq.s32.totalorder %s29, 1
    %p199 = por %p197, %p198
    %p200 = scmp.ne.s32.totalorder %s191, %s192
    %p201 = scmp.eq.s32.totalorder %s29, 0
    %p202 = por %p200, %p201
    %p203 = scmp.ne.s32.totalorder %s191, %s192
    %p204 = scmp.eq.s32.totalorder %s30, 1
    %p205 = por %p203, %p204
    %p207 = scmp.ne.s32.totalorder %s192, %s206
    %p208 = scmp.eq.s32.totalorder %s30, 0
    %p209 = por %p207, %p208
    %s211 = sadd.s32 %s210, 1
    %p214 = scmp.eq.s32.totalorder %s24, 1
    %p215 = scmp.ne.s32.totalorder %s210, %s212
    %p216 = scmp.eq.s32.totalorder %s24, 0
    %p217 = por %p215, %p216
    %p218 = scmp.ne.s32.totalorder %s210, %s212
    %p219 = scmp.eq.s32.totalorder %s29, 1
    %p220 = por %p218, %p219
    %p221 = scmp.ne.s32.totalorder %s212, %s213
    %p222 = scmp.eq.s32.totalorder %s29, 0
    %p223 = por %p221, %p222
    %p224 = scmp.ne.s32.totalorder %s212, %s213
    %p225 = scmp.eq.s32.totalorder %s30, 1
    %p226 = por %p224, %p225
    %p228 = scmp.ne.s32.totalorder %s213, %s227
    %p229 = scmp.eq.s32.totalorder %s30, 0
    %p230 = por %p228, %p229
    %s232 = sadd.s32 %s231, 1
    %p235 = scmp.eq.s32.totalorder %s24, 1
    %p236 = scmp.ne.s32.totalorder %s231, %s233
    %p237 = scmp.eq.s32.totalorder %s24, 0
    %p238 = por %p236, %p237
    %p239 = scmp.ne.s32.totalorder %s231, %s233
    %p240 = scmp.eq.s32.totalorder %s29, 1
    %p241 = por %p239, %p240
    %p242 = scmp.ne.s32.totalorder %s233, %s234
    %p243 = scmp.eq.s32.totalorder %s29, 0
    %p244 = por %p242, %p243
    %p245 = scmp.ne.s32.totalorder %s233, %s234
    %p246 = scmp.eq.s32.totalorder %s30, 1
    %p247 = por %p245, %p246
    %p249 = scmp.ne.s32.totalorder %s234, %s248
    %p250 = scmp.eq.s32.totalorder %s30, 0
    %p251 = por %p249, %p250
    %s253 = sadd.s32 %s252, 1
    %p256 = scmp.eq.s32.totalorder %s24, 1
    %p257 = scmp.ne.s32.totalorder %s252, %s254
    %p258 = scmp.eq.s32.totalorder %s24, 0
    %p259 = por %p257, %p258
    %p260 = scmp.ne.s32.totalorder %s252, %s254
    %p261 = scmp.eq.s32.totalorder %s29, 1
    %p262 = por %p260, %p261
    %p263 = scmp.ne.s32.totalorder %s254, %s255
    %p264 = scmp.eq.s32.totalorder %s29, 0
    %p265 = por %p263, %p264
    %p266 = scmp.ne.s32.totalorder %s254, %s255
    %p267 = scmp.eq.s32.totalorder %s30, 1
    %p268 = por %p266, %p267
    %p270 = scmp.ne.s32.totalorder %s255, %s269
    %p271 = scmp.eq.s32.totalorder %s30, 0
    %p272 = por %p270, %p271
    %s274 = sadd.s32 %s273, 1
    %p277 = scmp.eq.s32.totalorder %s24, 1
    %p278 = scmp.ne.s32.totalorder %s273, %s275
    %p279 = scmp.eq.s32.totalorder %s24, 0
    %p280 = por %p278, %p279
    %p281 = scmp.ne.s32.totalorder %s273, %s275
    %p282 = scmp.eq.s32.totalorder %s29, 1
    %p283 = por %p281, %p282
    %p284 = scmp.ne.s32.totalorder %s275, %s276
    %p285 = scmp.eq.s32.totalorder %s29, 0
    %p286 = por %p284, %p285
    %p287 = scmp.ne.s32.totalorder %s275, %s276
    %p288 = scmp.eq.s32.totalorder %s30, 1
    %p289 = por %p287, %p288
    %p291 = scmp.ne.s32.totalorder %s276, %s290
    %p292 = scmp.eq.s32.totalorder %s30, 0
    %p293 = por %p291, %p292
    %s295 = sadd.s32 %s294, 1
    %p298 = scmp.eq.s32.totalorder %s24, 1
    %p299 = scmp.ne.s32.totalorder %s294, %s296
    %p300 = scmp.eq.s32.totalorder %s24, 0
    %p301 = por %p299, %p300
    %p302 = scmp.ne.s32.totalorder %s294, %s296
    %p303 = scmp.eq.s32.totalorder %s29, 1
    %p304 = por %p302, %p303
    %p305 = scmp.ne.s32.totalorder %s296, %s297
    %p306 = scmp.eq.s32.totalorder %s29, 0
    %p307 = por %p305, %p306
    %p308 = scmp.ne.s32.totalorder %s296, %s297
    %p309 = scmp.eq.s32.totalorder %s30, 1
    %p310 = por %p308, %p309
    %p312 = scmp.ne.s32.totalorder %s297, %s311
    %p313 = scmp.eq.s32.totalorder %s30, 0
    %p314 = por %p312, %p313
    %s316 = sadd.s32 %s315, 1
    %p319 = scmp.eq.s32.totalorder %s24, 1
    %p320 = scmp.ne.s32.totalorder %s315, %s317
    %p321 = scmp.eq.s32.totalorder %s24, 0
    %p322 = por %p320, %p321
    %p323 = scmp.ne.s32.totalorder %s315, %s317
    %p324 = scmp.eq.s32.totalorder %s29, 1
    %p325 = por %p323, %p324
    %p326 = scmp.ne.s32.totalorder %s317, %s318
    %p327 = scmp.eq.s32.totalorder %s29, 0
    %p328 = por %p326, %p327
    %p329 = scmp.ne.s32.totalorder %s317, %s318
    %p330 = scmp.eq.s32.totalorder %s30, 1
    %p331 = por %p329, %p330
    %p333 = scmp.ne.s32.totalorder %s318, %s332
    %p334 = scmp.eq.s32.totalorder %s30, 0
    %p335 = por %p333, %p334
    %s337 = sadd.s32 %s336, 1
    %p340 = scmp.eq.s32.totalorder %s24, 1
    %p341 = scmp.ne.s32.totalorder %s336, %s338
    %p342 = scmp.eq.s32.totalorder %s24, 0
    %p343 = por %p341, %p342
    %p344 = scmp.ne.s32.totalorder %s336, %s338
    %p345 = scmp.eq.s32.totalorder %s29, 1
    %p346 = por %p344, %p345
    %p347 = scmp.ne.s32.totalorder %s338, %s339
    %p348 = scmp.eq.s32.totalorder %s29, 0
    %p349 = por %p347, %p348
    %p350 = scmp.ne.s32.totalorder %s338, %s339
    %p351 = scmp.eq.s32.totalorder %s30, 1
    %p352 = por %p350, %p351
    %p354 = scmp.ne.s32.totalorder %s339, %s353
    %p355 = scmp.eq.s32.totalorder %s30, 0
    %p356 = por %p354, %p355
    %s358 = sadd.s32 %s357, 1
    %p361 = scmp.eq.s32.totalorder %s24, 1
    %p362 = scmp.ne.s32.totalorder %s357, %s359
    %p363 = scmp.eq.s32.totalorder %s24, 0
    %p364 = por %p362, %p363
    %p365 = scmp.ne.s32.totalorder %s357, %s359
    %p366 = scmp.eq.s32.totalorder %s29, 1
    %p367 = por %p365, %p366
    %p368 = scmp.ne.s32.totalorder %s359, %s360
    %p369 = scmp.eq.s32.totalorder %s29, 0
    %p370 = por %p368, %p369
    %p371 = scmp.ne.s32.totalorder %s359, %s360
    %p372 = scmp.eq.s32.totalorder %s30, 1
    %p373 = por %p371, %p372
    %p375 = scmp.ne.s32.totalorder %s360, %s374
    %p376 = scmp.eq.s32.totalorder %s30, 0
    %p377 = por %p375, %p376
    %s378 = ssub.s32 %s24, %s31
    %p379 = scmp.eq.s32.totalorder %s378, 0
    %s381 = sadd.s32 %s380, 1
    %s382 = scalar_select %p379, %s380, %s381
    %p385 = pneg %p379
    %p386 = scmp.eq.s32.totalorder %s24, 1
    %p387 = por %p385, %p386
    %p388 = scmp.ne.s32.totalorder %s380, %s383
    %p389 = scmp.eq.s32.totalorder %s24, 0
    %p390 = por %p388, %p389
    %p391 = scmp.ne.s32.totalorder %s380, %s383
    %p392 = scmp.eq.s32.totalorder %s29, 1
    %p393 = por %p391, %p392
    %p394 = scmp.ne.s32.totalorder %s383, %s384
    %p395 = scmp.eq.s32.totalorder %s29, 0
    %p396 = por %p394, %p395
    %p397 = scmp.ne.s32.totalorder %s383, %s384
    %p398 = scmp.eq.s32.totalorder %s30, 1
    %p399 = por %p397, %p398
    %p401 = scmp.ne.s32.totalorder %s384, %s400
    %p402 = scmp.eq.s32.totalorder %s30, 0
    %p403 = por %p401, %p402
    %p404 = scmp.le.s32.totalorder 1, %s24
    %p405 = scmp.lt.s32.totalorder %s24, 3
    %p406 = pnand %p404, %p405
    %p407 = pneg %p406
    // Predicated region
    $region9: #{val_forward.1} parent=5 // pred_check
      _
    $region10: #{val_forward.1} parent=5 // pred_check_branch
      %409 = sbr.rel (%p406) target = $region12
    $region11: #{val_forward.1} parent=5 // pred_region
      %s410 = ssub.s32 %s24, 1
      // Predicated region
      $region13: #{val_forward.1} parent=11 // pred_check
        %p411 = pneg %p97
      $region14: #{val_forward.1} parent=11 // pred_check_branch
        %413 = sbr.rel (%p411) target = $region16
      $region15: #{val_forward.1} parent=11 // pred_region
        _
      $region16: #{val_forward.1} parent=11 // pred_fallthru
        _
      // Predicated region
      $region17: #{val_forward.1} parent=11 // pred_check
        %p414 = pneg %p118
      $region18: #{val_forward.1} parent=11 // pred_check_branch
        %416 = sbr.rel (%p414) target = $region20
      $region19: #{val_forward.1} parent=11 // pred_region
        _
      $region20: #{val_forward.1} parent=11 // pred_fallthru
        _
      // Predicated region
      $region21: #{val_forward.1} parent=11 // pred_check
        %p417 = pneg %p139
      $region22: #{val_forward.1} parent=11 // pred_check_branch
        %419 = sbr.rel (%p417) target = $region24
      $region23: #{val_forward.1} parent=11 // pred_region
        _
      $region24: #{val_forward.1} parent=11 // pred_fallthru
        _
      // Predicated region
      $region25: #{val_forward.1} parent=11 // pred_check
        %p420 = pneg %p160
      $region26: #{val_forward.1} parent=11 // pred_check_branch
        %422 = sbr.rel (%p420) target = $region28
      $region27: #{val_forward.1} parent=11 // pred_region
        _
      $region28: #{val_forward.1} parent=11 // pred_fallthru
        _
      // Predicated region
      $region29: #{val_forward.1} parent=11 // pred_check
        %p423 = pneg %p181
      $region30: #{val_forward.1} parent=11 // pred_check_branch
        %425 = sbr.rel (%p423) target = $region32
      $region31: #{val_forward.1} parent=11 // pred_region
        _
      $region32: #{val_forward.1} parent=11 // pred_fallthru
        _
      // Predicated region
      $region33: #{val_forward.1} parent=11 // pred_check
        %p426 = pneg %p202
      $region34: #{val_forward.1} parent=11 // pred_check_branch
        %428 = sbr.rel (%p426) target = $region36
      $region35: #{val_forward.1} parent=11 // pred_region
        _
      $region36: #{val_forward.1} parent=11 // pred_fallthru
        _
      // Predicated region
      $region37: #{val_forward.1} parent=11 // pred_check
        %p429 = pneg %p223
      $region38: #{val_forward.1} parent=11 // pred_check_branch
        %431 = sbr.rel (%p429) target = $region40
      $region39: #{val_forward.1} parent=11 // pred_region
        _
      $region40: #{val_forward.1} parent=11 // pred_fallthru
        _
      // Predicated region
      $region41: #{val_forward.1} parent=11 // pred_check
        %p432 = pneg %p244
      $region42: #{val_forward.1} parent=11 // pred_check_branch
        %434 = sbr.rel (%p432) target = $region44
      $region43: #{val_forward.1} parent=11 // pred_region
        _
      $region44: #{val_forward.1} parent=11 // pred_fallthru
        _
      // Predicated region
      $region45: #{val_forward.1} parent=11 // pred_check
        %p435 = pneg %p265
      $region46: #{val_forward.1} parent=11 // pred_check_branch
        %437 = sbr.rel (%p435) target = $region48
      $region47: #{val_forward.1} parent=11 // pred_region
        _
      $region48: #{val_forward.1} parent=11 // pred_fallthru
        _
      // Predicated region
      $region49: #{val_forward.1} parent=11 // pred_check
        %p438 = pneg %p286
      $region50: #{val_forward.1} parent=11 // pred_check_branch
        %440 = sbr.rel (%p438) target = $region52
      $region51: #{val_forward.1} parent=11 // pred_region
        _
      $region52: #{val_forward.1} parent=11 // pred_fallthru
        _
      // Predicated region
      $region53: #{val_forward.1} parent=11 // pred_check
        %p441 = pneg %p307
      $region54: #{val_forward.1} parent=11 // pred_check_branch
        %443 = sbr.rel (%p441) target = $region56
      $region55: #{val_forward.1} parent=11 // pred_region
        _
      $region56: #{val_forward.1} parent=11 // pred_fallthru
        _
      // Predicated region
      $region57: #{val_forward.1} parent=11 // pred_check
        %p444 = pneg %p328
      $region58: #{val_forward.1} parent=11 // pred_check_branch
        %446 = sbr.rel (%p444) target = $region60
      $region59: #{val_forward.1} parent=11 // pred_region
        _
      $region60: #{val_forward.1} parent=11 // pred_fallthru
        _
      // Predicated region
      $region61: #{val_forward.1} parent=11 // pred_check
        %p447 = pneg %p349
      $region62: #{val_forward.1} parent=11 // pred_check_branch
        %449 = sbr.rel (%p447) target = $region64
      $region63: #{val_forward.1} parent=11 // pred_region
        _
      $region64: #{val_forward.1} parent=11 // pred_fallthru
        _
      // Predicated region
      $region65: #{val_forward.1} parent=11 // pred_check
        %p450 = pneg %p370
      $region66: #{val_forward.1} parent=11 // pred_check_branch
        %452 = sbr.rel (%p450) target = $region68
      $region67: #{val_forward.1} parent=11 // pred_region
        _
      $region68: #{val_forward.1} parent=11 // pred_fallthru
        _
    $region12: #{val_forward.1} parent=5 // pred_fallthru
      _
    %p453 = scmp.lt.s32.totalorder %s24, 2
    // Predicated region
    $region69: #{val_forward.1} parent=5 // pred_check
      %p454 = pneg %p453
    $region70: #{val_forward.1} parent=5 // pred_check_branch
      %456 = sbr.rel (%p454) target = $region72
    $region71: #{val_forward.1} parent=5 // pred_region
      // Predicated region
      $region73: #{val_forward.1} parent=71 // pred_check
        %p457 = pneg %p44
      $region74: #{val_forward.1} parent=71 // pred_check_branch
        %459 = sbr.rel (%p457) target = $region76
      $region75: #{val_forward.1} parent=71 // pred_region
        %p460 = scmp.lt.s32.totalorder %s24, 1
        %s461 = scalar_select %p460, %s24, 1
        %s462 = smul.addr %s461, 8
        %s463 = scalar_lea.vmem %s0, %s462
      $region76: #{val_forward.1} parent=71 // pred_fallthru
        _
      // Predicated region
      $region77: #{val_forward.1} parent=71 // pred_check
        %p464 = pneg %p70
      $region78: #{val_forward.1} parent=71 // pred_check_branch
        %466 = sbr.rel (%p464) target = $region80
      $region79: #{val_forward.1} parent=71 // pred_region
        %p467 = scmp.lt.s32.totalorder %s24, 1
        %s468 = scalar_select %p467, %s24, 1
        %s469 = scalar_lea.vmem %s1, %s468
      $region80: #{val_forward.1} parent=71 // pred_fallthru
        _
    $region72: #{val_forward.1} parent=5 // pred_fallthru
      _
    %p470 = scmp.le.s32.totalorder 1, %s24
    %p471 = scmp.lt.s32.totalorder %s24, 3
    %p472 = pnand %p470, %p471
    %p473 = pneg %p472
    // Predicated region
    $region81: #{val_forward.1} parent=5 // pred_check
      _
    $region82: #{val_forward.1} parent=5 // pred_check_branch
      %475 = sbr.rel (%p472) target = $region84
    $region83: #{val_forward.1} parent=5 // pred_region
      %s476 = ssub.s32 %s24, 1
      %p477 = scmp.lt.s32.totalorder %s29, 1
      %s478 = scalar_select %p477, %s29, 1
      %s479 = smul.addr %s478, 8
      %s480 = scalar_lea.vmem %s0, %s479
      %p481 = pneg %p50
      %p482 = pneg %p47
      %p483 = scmp.lt.s32.totalorder %s29, 1
      %s484 = scalar_select %p483, %s29, 1
      %s485 = scalar_lea.vmem %s1, %s484
      %p486 = pneg %p76
      %p487 = pneg %p73
      %p488 = pneg %p97
      %p489 = pneg %p94
      %p490 = pneg %p118
      %p491 = pneg %p115
      %p492 = pneg %p139
      %p493 = pneg %p136
      %p494 = pneg %p160
      %p495 = pneg %p157
      %p496 = pneg %p181
      %p497 = pneg %p178
      %p498 = pneg %p202
      %p499 = pneg %p199
      %p500 = pneg %p223
      %p501 = pneg %p220
      %p502 = pneg %p244
      %p503 = pneg %p241
      %p504 = pneg %p265
      %p505 = pneg %p262
      %p506 = pneg %p286
      %p507 = pneg %p283
      %p508 = pneg %p307
      %p509 = pneg %p304
      %p510 = pneg %p328
      %p511 = pneg %p325
      %p512 = pneg %p349
      %p513 = pneg %p346
      %p514 = pneg %p370
      %p515 = pneg %p367
      %p516 = pneg %p396
      %p517 = pneg %p393
      %p518 = scmp.lt.s32.totalorder %s29, 1
      %s519 = scalar_select %p518, %s29, 1
      %s520 = smul.addr %s519, 8
      %s521 = scalar_lea.vmem %s16, %s520
      %p522 = scmp.lt.s32.totalorder %s29, 1
      %s523 = scalar_select %p522, %s29, 1
      %s524 = smul.addr %s523, 8
      %s525 = scalar_lea.vmem %s0, %s524
      %p526 = scmp.lt.s32.totalorder %s29, 1
      %s527 = scalar_select %p526, %s29, 1
      %s528 = scalar_lea.vmem %s1, %s527
      %p529 = scmp.lt.s32.totalorder %s29, 1
      %s530 = scalar_select %p529, %s29, 1
      %s531 = smul.addr %s530, 8
      %s532 = scalar_lea.vmem %s16, %s531
      %v533 = vld [vmem:[%s525] sm:$0xff]
      %v534 = vld [vmem:[%s2] sm:$0xff]
      %v535 = vld [vmem:[%s3] sm:$0xff]
      %v536 = vld [vmem:[%s528] sm:$0x1]
      %v538 = vlaneseq
      %v539 = vshrl.u32 %v538, 7
      %v540 = vsub.s32 0, %v539
      %v541 = vrot.slane %v536, %v540
      %v543 = vmul.f32 %v535, %v541
      %vm544 = vcmask 130048
      %v545 = vsel %vm544, %v543, 0.0
      %546 = vadd.xlane.f32.xlu0 %v545
      %v547 = vpop.xlane.xlu0 %546
      %vm548 = vcmask 64512
      %v550 = vsel %vm548, %v534, 0
      %552 = vmatprep.subr.mxu0 0.0
      %553 = vmatpush1.msra.mxu0 %v533
      %554 = vmatprep.subr.mxu0 0.0
      %555 = vmatpush1.msra.mxu0 0.0
      %556 = vmatprep.subr.mxu0 0.0
      %557 = vmatpush1.msra.mxu0 0.0
      %558 = vmatprep.subr.mxu0 0.0
      %559 = vmatpush1.msra.mxu0 0.0
      %560 = vmatprep.subr.mxu0 0.0
      %561 = vmatpush1.msra.mxu0 0.0
      %562 = vmatprep.subr.mxu0 0.0
      %563 = vmatpush1.msra.mxu0 0.0
      %564 = vmatprep.subr.mxu0 0.0
      %565 = vmatpush1.msra.mxu0 0.0
      %566 = vmatprep.subr.mxu0 0.0
      %567 = vmatpush1.msra.mxu0 0.0
      %568 = vmatprep.subr.mxu0 0.0
      %569 = vmatpush1.msra.mxu0 0.0
      %570 = vmatprep.subr.mxu0 0.0
      %571 = vmatpush1.msra.mxu0 0.0
      %572 = vmatprep.subr.mxu0 0.0
      %573 = vmatpush1.msra.mxu0 0.0
      %574 = vmatprep.subr.mxu0 0.0
      %575 = vmatpush1.msra.mxu0 0.0
      %576 = vmatprep.subr.mxu0 0.0
      %577 = vmatpush1.msra.mxu0 0.0
      %578 = vmatprep.subr.mxu0 0.0
      %579 = vmatpush1.msra.mxu0 0.0
      %580 = vmatprep.subr.mxu0 0.0
      %581 = vmatpush1.msra.mxu0 0.0
      %582 = vmatprep.subr.mxu0 0.0
      %583 = vmatpush1.msra.mxu0 0.0
      %584 = vmatprep.subr.mxu0 0.0
      %585 = vmatpush1.msra.mxu0 0.0
      %586 = vmatprep.subr.mxu0 0.0
      %587 = vmatpush1.msra.mxu0 0.0
      %588 = vmatprep.subr.mxu0 0.0
      %589 = vmatpush1.msra.mxu0 0.0
      %590 = vmatprep.subr.mxu0 0.0
      %591 = vmatpush1.msra.mxu0 0.0
      %592 = vmatprep.subr.mxu0 0.0
      %593 = vmatpush1.msra.mxu0 0.0
      %594 = vmatprep.subr.mxu0 0.0
      %595 = vmatpush1.msra.mxu0 0.0
      %596 = vmatprep.subr.mxu0 0.0
      %597 = vmatpush1.msra.mxu0 0.0
      %598 = vmatprep.subr.mxu0 0.0
      %599 = vmatpush1.msra.mxu0 0.0
      %600 = vmatprep.subr.mxu0 0.0
      %601 = vmatpush1.msra.mxu0 0.0
      %602 = vmatprep.subr.mxu0 0.0
      %603 = vmatpush1.msra.mxu0 0.0
      %604 = vmatprep.subr.mxu0 0.0
      %605 = vmatpush1.msra.mxu0 0.0
      %606 = vmatprep.subr.mxu0 0.0
      %607 = vmatpush1.msra.mxu0 0.0
      %608 = vmatprep.subr.mxu0 0.0
      %609 = vmatpush1.msra.mxu0 0.0
      %610 = vmatprep.subr.mxu0 0.0
      %611 = vmatpush1.msra.mxu0 0.0
      %612 = vmatprep.subr.mxu0 0.0
      %613 = vmatpush1.msra.mxu0 0.0
      %614 = vmatprep.subr.mxu0 0.0
      %615 = vmatpush1.msra.mxu0 0.0
      %616 = vmatprep.mubr.f32.mxu0 0.0
      %617 = vmatmul.mubr.f32.gmra.mrb[0].mxu0 %v550
      %v618 = vpop.f32.mrb[0].mxu0
      %v619 = vadd.f32 %v547, %v618
      %v620 = vpop.f32.mrb[0].mxu0
      %621 = vdwg.mxu0
      %v622 = vld [vmem:[%s4] sm:$0xff]
      %624 = vset.pattern.permute.xlu0 0
      %625 = vperm.xlu0 %624, %v622
      %v626 = vpop.permute.xlu0 %625
      %v628 = vadd.f32 %v619, %v626
      %v629 = vlaneseq
      %v630 = vshrl.u32 %v629, 7
      %v631 = vadd.s32 %v630, 8
      %v632 = vadd.s32 %v630, 16
      %v633 = vadd.s32 %v630, 24
      %v634 = vadd.s32 %v630, 32
      %v635 = vadd.s32 %v630, 40
      %v636 = vadd.s32 %v630, 48
      %v637 = vadd.s32 %v630, 56
      %v638 = vlaneseq
      %v639 = vand.u32 %v638, 127
      %vm640 = vcmp.eq.s32.totalorder %v630, %v639
      %vm641 = vcmp.eq.s32.totalorder %v631, %v639
      %vm642 = vcmp.eq.s32.totalorder %v632, %v639
      %vm643 = vcmp.eq.s32.totalorder %v633, %v639
      %vm644 = vcmp.eq.s32.totalorder %v634, %v639
      %vm645 = vcmp.eq.s32.totalorder %v635, %v639
      %vm646 = vcmp.eq.s32.totalorder %v636, %v639
      %vm647 = vcmp.eq.s32.totalorder %v637, %v639
      %v648 = vsel %vm640, 1, 0
      %v649 = vsel %vm641, 1, 0
      %v650 = vsel %vm642, 1, 0
      %v651 = vsel %vm643, 1, 0
      %v652 = vsel %vm644, 1, 0
      %v653 = vsel %vm645, 1, 0
      %v654 = vsel %vm646, 1, 0
      %v655 = vsel %vm647, 1, 0
      %v656 = vcvt.s32.f32 %v648
      %v657 = vcvt.s32.f32 %v649
      %v658 = vcvt.s32.f32 %v650
      %v659 = vcvt.s32.f32 %v651
      %v660 = vcvt.s32.f32 %v652
      %v661 = vcvt.s32.f32 %v653
      %v662 = vcvt.s32.f32 %v654
      %v663 = vcvt.s32.f32 %v655
      %vm664 = vcmask 523264
      %v666 = vsel %vm664, %v656, 0
      %v669 = vsel %vm664, %v657, 0
      %v672 = vsel %vm664, %v658, 0
      %v675 = vsel %vm664, %v659, 0
      %v678 = vsel %vm664, %v660, 0
      %v681 = vsel %vm664, %v661, 0
      %v684 = vsel %vm664, %v662, 0
      %v687 = vsel %vm664, %v663, 0
      %v690 = vsel %vm664, %v628, 0
      %692 = vmatprep.subr.mxu0 0.0
      %693 = vmatpush1.xpose.msra.mxu0 %v690
      %694 = vmatprep.subr.mxu0 0.0
      %695 = vmatpush1.xpose.msra.mxu0 0.0
      %696 = vmatprep.subr.mxu0 0.0
      %697 = vmatpush1.xpose.msra.mxu0 0.0
      %698 = vmatprep.subr.mxu0 0.0
      %699 = vmatpush1.xpose.msra.mxu0 0.0
      %700 = vmatprep.subr.mxu0 0.0
      %701 = vmatpush1.xpose.msra.mxu0 0.0
      %702 = vmatprep.subr.mxu0 0.0
      %703 = vmatpush1.xpose.msra.mxu0 0.0
      %704 = vmatprep.subr.mxu0 0.0
      %705 = vmatpush1.xpose.msra.mxu0 0.0
      %706 = vmatprep.subr.mxu0 0.0
      %707 = vmatpush1.xpose.msra.mxu0 0.0
      %708 = vmatprep.subr.mxu0 0.0
      %709 = vmatpush1.xpose.msra.mxu0 0.0
      %710 = vmatprep.subr.mxu0 0.0
      %711 = vmatpush1.xpose.msra.mxu0 0.0
      %712 = vmatprep.subr.mxu0 0.0
      %713 = vmatpush1.xpose.msra.mxu0 0.0
      %714 = vmatprep.subr.mxu0 0.0
      %715 = vmatpush1.xpose.msra.mxu0 0.0
      %716 = vmatprep.subr.mxu0 0.0
      %717 = vmatpush1.xpose.msra.mxu0 0.0
      %718 = vmatprep.subr.mxu0 0.0
      %719 = vmatpush1.xpose.msra.mxu0 0.0
      %720 = vmatprep.subr.mxu0 0.0
      %721 = vmatpush1.xpose.msra.mxu0 0.0
      %722 = vmatprep.subr.mxu0 0.0
      %723 = vmatpush1.xpose.msra.mxu0 0.0
      %724 = vmatprep.subr.mxu0 0.0
      %725 = vmatpush1.xpose.msra.mxu0 0.0
      %726 = vmatprep.subr.mxu0 0.0
      %727 = vmatpush1.xpose.msra.mxu0 0.0
      %728 = vmatprep.subr.mxu0 0.0
      %729 = vmatpush1.xpose.msra.mxu0 0.0
      %730 = vmatprep.subr.mxu0 0.0
      %731 = vmatpush1.xpose.msra.mxu0 0.0
      %732 = vmatprep.subr.mxu0 0.0
      %733 = vmatpush1.xpose.msra.mxu0 0.0
      %734 = vmatprep.subr.mxu0 0.0
      %735 = vmatpush1.xpose.msra.mxu0 0.0
      %736 = vmatprep.subr.mxu0 0.0
      %737 = vmatpush1.xpose.msra.mxu0 0.0
      %738 = vmatprep.subr.mxu0 0.0
      %739 = vmatpush1.xpose.msra.mxu0 0.0
      %740 = vmatprep.subr.mxu0 0.0
      %741 = vmatpush1.xpose.msra.mxu0 0.0
      %742 = vmatprep.subr.mxu0 0.0
      %743 = vmatpush1.xpose.msra.mxu0 0.0
      %744 = vmatprep.subr.mxu0 0.0
      %745 = vmatpush1.xpose.msra.mxu0 0.0
      %746 = vmatprep.subr.mxu0 0.0
      %747 = vmatpush1.xpose.msra.mxu0 0.0
      %748 = vmatprep.subr.mxu0 0.0
      %749 = vmatpush1.xpose.msra.mxu0 0.0
      %750 = vmatprep.subr.mxu0 0.0
      %751 = vmatpush1.xpose.msra.mxu0 0.0
      %752 = vmatprep.subr.mxu0 0.0
      %753 = vmatpush1.xpose.msra.mxu0 0.0
      %754 = vmatprep.subr.mxu0 0.0
      %755 = vmatpush1.xpose.msra.mxu0 0.0
      %756 = vmatprep.mubr.f32.mxu0 0.0
      %757 = vmatmul.mubr.f32.gmra.mrb[0].mxu0 %v666
      %v758 = vpop.f32.mrb[0].mxu0
      %v759 = vadd.f32 0.0, %v758
      %v760 = vpop.f32.mrb[0].mxu0
      %761 = vmatprep.mubr.f32.mxu0 0.0
      %762 = vmatmul.mubr.f32.gmra.mrb[0].mxu0 %v669
      %v763 = vpop.f32.mrb[0].mxu0
      %v764 = vadd.f32 0.0, %v763
      %v765 = vpop.f32.mrb[0].mxu0
      %766 = vmatprep.mubr.f32.mxu0 0.0
      %767 = vmatmul.mubr.f32.gmra.mrb[0].mxu0 %v672
      %v768 = vpop.f32.mrb[0].mxu0
      %v769 = vadd.f32 0.0, %v768
      %v770 = vpop.f32.mrb[0].mxu0
      %771 = vmatprep.mubr.f32.mxu0 0.0
      %772 = vmatmul.mubr.f32.gmra.mrb[0].mxu0 %v675
      %v773 = vpop.f32.mrb[0].mxu0
      %v774 = vadd.f32 0.0, %v773
      %v775 = vpop.f32.mrb[0].mxu0
      %776 = vmatprep.mubr.f32.mxu0 0.0
      %777 = vmatmul.mubr.f32.gmra.mrb[0].mxu0 %v678
      %v778 = vpop.f32.mrb[0].mxu0
      %v779 = vadd.f32 0.0, %v778
      %v780 = vpop.f32.mrb[0].mxu0
      %781 = vmatprep.mubr.f32.mxu0 0.0
      %782 = vmatmul.mubr.f32.gmra.mrb[0].mxu0 %v681
      %v783 = vpop.f32.mrb[0].mxu0
      %v784 = vadd.f32 0.0, %v783
      %v785 = vpop.f32.mrb[0].mxu0
      %786 = vmatprep.mubr.f32.mxu0 0.0
      %787 = vmatmul.mubr.f32.gmra.mrb[0].mxu0 %v684
      %v788 = vpop.f32.mrb[0].mxu0
      %v789 = vadd.f32 0.0, %v788
      %v790 = vpop.f32.mrb[0].mxu0
      %791 = vmatprep.mubr.f32.mxu0 0.0
      %792 = vmatmul.mubr.f32.gmra.mrb[0].mxu0 %v687
      %v793 = vpop.f32.mrb[0].mxu0
      %v794 = vadd.f32 0.0, %v793
      %v795 = vpop.f32.mrb[0].mxu0
      %796 = vdwg.mxu0
      %v797 = vsel %vm548, %v759, 0.0
      %v798 = vsel %vm548, %v764, 0.0
      %v799 = vadd.f32 %v797, %v798
      %v800 = vsel %vm548, %v769, 0.0
      %v801 = vadd.f32 %v799, %v800
      %v802 = vsel %vm548, %v774, 0.0
      %v803 = vadd.f32 %v801, %v802
      %v804 = vsel %vm548, %v779, 0.0
      %v805 = vadd.f32 %v803, %v804
      %v806 = vsel %vm548, %v784, 0.0
      %v807 = vadd.f32 %v805, %v806
      %v808 = vsel %vm548, %v789, 0.0
      %v809 = vadd.f32 %v807, %v808
      %v810 = vsel %vm548, %v794, 0.0
      %v811 = vadd.f32 %v809, %v810
      %v812 = vrot.slane %v811, 4
      %v813 = vadd.f32 %v811, %v812
      %v814 = vrot.slane %v813, 2
      %v815 = vadd.f32 %v813, %v814
      %v816 = vrot.slane %v815, 1
      %v817 = vadd.f32 %v815, %v816
      %v818 = vrcp.pop 64.0
      %v819 = vmul.f32 %v817, %v818
      %v820 = vld [vmem:[%s5] sm:$0xff]
      %v821 = vmul.f32 %v820, %v819
      %v822 = vsel %vm548, %v821, 0.0
      %823 = vadd.xlane.f32.xlu0 %v822
      %v824 = vpop.xlane.xlu0 %823
      %v825 = vld [vmem:[%s6] sm:$0xff]
      %v826 = vadd.f32 %v824, %v825
      %v827 = vxor.u32 %v826, 2147483648
      %v828 = vmul.f32 %v827, 1.442695
      %v829 = vpow.pop %v828
      %v830 = vadd.f32 %v829, 1.0
      %v831 = vrcp.pop %v830
      %v832 = vmul.f32 1.0, %v831
      %833 = vadd.xlane.f32.xlu0 %v797
      %v834 = vpop.xlane.xlu0 %833
      %835 = vadd.xlane.f32.xlu0 %v798
      %v836 = vpop.xlane.xlu0 %835
      %837 = vadd.xlane.f32.xlu0 %v800
      %v838 = vpop.xlane.xlu0 %837
      %839 = vadd.xlane.f32.xlu0 %v802
      %v840 = vpop.xlane.xlu0 %839
      %841 = vadd.xlane.f32.xlu0 %v804
      %v842 = vpop.xlane.xlu0 %841
      %843 = vadd.xlane.f32.xlu0 %v806
      %v844 = vpop.xlane.xlu0 %843
      %845 = vadd.xlane.f32.xlu0 %v808
      %v846 = vpop.xlane.xlu0 %845
      %847 = vadd.xlane.f32.xlu0 %v810
      %v848 = vpop.xlane.xlu0 %847
      %v849 = vrcp.pop 8.0
      %v850 = vmul.f32 %v834, %v849
      %v851 = vmul.f32 %v836, %v849
      %v852 = vmul.f32 %v838, %v849
      %v853 = vmul.f32 %v840, %v849
      %v854 = vmul.f32 %v842, %v849
      %v855 = vmul.f32 %v844, %v849
      %v856 = vmul.f32 %v846, %v849
      %v857 = vmul.f32 %v848, %v849
      %v858 = vld [vmem:[%s7] sm:$0xff]
      %v859 = vld [vmem:[%s7 + $0x8] sm:$0xff]
      %v860 = vld [vmem:[%s7 + $0x10] sm:$0xff]
      %v861 = vld [vmem:[%s7 + $0x18] sm:$0xff]
      %v862 = vld [vmem:[%s7 + $0x20] sm:$0xff]
      %v863 = vld [vmem:[%s7 + $0x28] sm:$0xff]
      %v864 = vld [vmem:[%s7 + $0x30] sm:$0xff]
      %v865 = vld [vmem:[%s7 + $0x38] sm:$0xff]
      %v866 = vmul.f32 %v858, %v850
      %v867 = vmul.f32 %v859, %v851
      %v868 = vmul.f32 %v860, %v852
      %v869 = vmul.f32 %v861, %v853
      %v870 = vmul.f32 %v862, %v854
      %v871 = vmul.f32 %v863, %v855
      %v872 = vmul.f32 %v864, %v856
      %v873 = vmul.f32 %v865, %v857
      %v874 = vsel %vm664, %v866, 0.0
      %v875 = vsel %vm664, %v867, 0.0
      %v876 = vadd.f32 %v874, %v875
      %v877 = vsel %vm664, %v868, 0.0
      %v878 = vadd.f32 %v876, %v877
      %v879 = vsel %vm664, %v869, 0.0
      %v880 = vadd.f32 %v878, %v879
      %v881 = vsel %vm664, %v870, 0.0
      %v882 = vadd.f32 %v880, %v881
      %v883 = vsel %vm664, %v871, 0.0
      %v884 = vadd.f32 %v882, %v883
      %v885 = vsel %vm664, %v872, 0.0
      %v886 = vadd.f32 %v884, %v885
      %v887 = vsel %vm664, %v873, 0.0
      %v888 = vadd.f32 %v886, %v887
      %v889 = vrot.slane %v888, 4
      %v890 = vadd.f32 %v888, %v889
      %v891 = vrot.slane %v890, 2
      %v892 = vadd.f32 %v890, %v891
      %v893 = vrot.slane %v892, 1
      %v894 = vadd.f32 %v892, %v893
      %v895 = vld [vmem:[#allocation2] sm:$0x1]
      %897 = vset.pattern.permute.xlu0 0
      %898 = vperm.xlu0 %897, %v895
      %v899 = vpop.permute.xlu0 %898
      %v901 = vlaneseq
      %v902 = vshrl.u32 %v901, 7
      %v903 = vsub.s32 0, %v902
      %v904 = vrot.slane %v899, %v903
      %v905 = vadd.f32 %v894, %v904
      %v906 = vxor.u32 %v905, 2147483648
      %v907 = vmul.f32 %v906, 1.442695
      %v908 = vpow.pop %v907
      %v909 = vadd.f32 %v908, 1.0
      %v910 = vrcp.pop %v909
      %v911 = vmul.f32 1.0, %v910
      %v912 = vld [vmem:[%s9] sm:$0xf]
      %v914 = vsel %vm548, %v759, 0
      %v917 = vsel %vm548, %v764, 0
      %v920 = vsel %vm548, %v769, 0
      %v923 = vsel %vm548, %v774, 0
      %v926 = vsel %vm548, %v779, 0
      %v929 = vsel %vm548, %v784, 0
      %v932 = vsel %vm548, %v789, 0
      %v935 = vsel %vm548, %v794, 0
      %v938 = vsel %vm548, %v912, 0
      %940 = vmatprep.subr.mxu0 0.0
      %941 = vmatpush1.xpose.msra.mxu0 %v938
      %942 = vmatprep.subr.mxu0 0.0
      %943 = vmatpush1.xpose.msra.mxu0 0.0
      %944 = vmatprep.subr.mxu0 0.0
      %945 = vmatpush1.xpose.msra.mxu0 0.0
      %946 = vmatprep.subr.mxu0 0.0
      %947 = vmatpush1.xpose.msra.mxu0 0.0
      %948 = vmatprep.subr.mxu0 0.0
      %949 = vmatpush1.xpose.msra.mxu0 0.0
      %950 = vmatprep.subr.mxu0 0.0
      %951 = vmatpush1.xpose.msra.mxu0 0.0
      %952 = vmatprep.subr.mxu0 0.0
      %953 = vmatpush1.xpose.msra.mxu0 0.0
      %954 = vmatprep.subr.mxu0 0.0
      %955 = vmatpush1.xpose.msra.mxu0 0.0
      %956 = vmatprep.subr.mxu0 0.0
      %957 = vmatpush1.xpose.msra.mxu0 0.0
      %958 = vmatprep.subr.mxu0 0.0
      %959 = vmatpush1.xpose.msra.mxu0 0.0
      %960 = vmatprep.subr.mxu0 0.0
      %961 = vmatpush1.xpose.msra.mxu0 0.0
      %962 = vmatprep.subr.mxu0 0.0
      %963 = vmatpush1.xpose.msra.mxu0 0.0
      %964 = vmatprep.subr.mxu0 0.0
      %965 = vmatpush1.xpose.msra.mxu0 0.0
      %966 = vmatprep.subr.mxu0 0.0
      %967 = vmatpush1.xpose.msra.mxu0 0.0
      %968 = vmatprep.subr.mxu0 0.0
      %969 = vmatpush1.xpose.msra.mxu0 0.0
      %970 = vmatprep.subr.mxu0 0.0
      %971 = vmatpush1.xpose.msra.mxu0 0.0
      %972 = vmatprep.subr.mxu0 0.0
      %973 = vmatpush1.xpose.msra.mxu0 0.0
      %974 = vmatprep.subr.mxu0 0.0
      %975 = vmatpush1.xpose.msra.mxu0 0.0
      %976 = vmatprep.subr.mxu0 0.0
      %977 = vmatpush1.xpose.msra.mxu0 0.0
      %978 = vmatprep.subr.mxu0 0.0
      %979 = vmatpush1.xpose.msra.mxu0 0.0
      %980 = vmatprep.subr.mxu0 0.0
      %981 = vmatpush1.xpose.msra.mxu0 0.0
      %982 = vmatprep.subr.mxu0 0.0
      %983 = vmatpush1.xpose.msra.mxu0 0.0
      %984 = vmatprep.subr.mxu0 0.0
      %985 = vmatpush1.xpose.msra.mxu0 0.0
      %986 = vmatprep.subr.mxu0 0.0
      %987 = vmatpush1.xpose.msra.mxu0 0.0
      %988 = vmatprep.subr.mxu0 0.0
      %989 = vmatpush1.xpose.msra.mxu0 0.0
      %990 = vmatprep.subr.mxu0 0.0
      %991 = vmatpush1.xpose.msra.mxu0 0.0
      %992 = vmatprep.subr.mxu0 0.0
      %993 = vmatpush1.xpose.msra.mxu0 0.0
      %994 = vmatprep.subr.mxu0 0.0
      %995 = vmatpush1.xpose.msra.mxu0 0.0
      %996 = vmatprep.subr.mxu0 0.0
      %997 = vmatpush1.xpose.msra.mxu0 0.0
      %998 = vmatprep.subr.mxu0 0.0
      %999 = vmatpush1.xpose.msra.mxu0 0.0
      %1000 = vmatprep.subr.mxu0 0.0
      %1001 = vmatpush1.xpose.msra.mxu0 0.0
      %1002 = vmatprep.subr.mxu0 0.0
      %1003 = vmatpush1.xpose.msra.mxu0 0.0
      %1004 = vmatprep.mubr.f32.mxu0 0.0
      %1005 = vmatmul.mubr.f32.gmra.mrb[0].mxu0 %v914
      %v1006 = vpop.f32.mrb[0].mxu0
      %v1007 = vadd.f32 0.0, %v1006
      %v1008 = vpop.f32.mrb[0].mxu0
      %1009 = vmatprep.mubr.f32.mxu0 0.0
      %1010 = vmatmul.mubr.f32.gmra.mrb[0].mxu0 %v917
      %v1011 = vpop.f32.mrb[0].mxu0
      %v1012 = vadd.f32 0.0, %v1011
      %v1013 = vpop.f32.mrb[0].mxu0
      %1014 = vmatprep.mubr.f32.mxu0 0.0
      %1015 = vmatmul.mubr.f32.gmra.mrb[0].mxu0 %v920
      %v1016 = vpop.f32.mrb[0].mxu0
      %v1017 = vadd.f32 0.0, %v1016
      %v1018 = vpop.f32.mrb[0].mxu0
      %1019 = vmatprep.mubr.f32.mxu0 0.0
      %1020 = vmatmul.mubr.f32.gmra.mrb[0].mxu0 %v923
      %v1021 = vpop.f32.mrb[0].mxu0
      %v1022 = vadd.f32 0.0, %v1021
      %v1023 = vpop.f32.mrb[0].mxu0
      %1024 = vmatprep.mubr.f32.mxu0 0.0
      %1025 = vmatmul.mubr.f32.gmra.mrb[0].mxu0 %v926
      %v1026 = vpop.f32.mrb[0].mxu0
      %v1027 = vadd.f32 0.0, %v1026
      %v1028 = vpop.f32.mrb[0].mxu0
      %1029 = vmatprep.mubr.f32.mxu0 0.0
      %1030 = vmatmul.mubr.f32.gmra.mrb[0].mxu0 %v929
      %v1031 = vpop.f32.mrb[0].mxu0
      %v1032 = vadd.f32 0.0, %v1031
      %v1033 = vpop.f32.mrb[0].mxu0
      %1034 = vmatprep.mubr.f32.mxu0 0.0
      %1035 = vmatmul.mubr.f32.gmra.mrb[0].mxu0 %v932
      %v1036 = vpop.f32.mrb[0].mxu0
      %v1037 = vadd.f32 0.0, %v1036
      %v1038 = vpop.f32.mrb[0].mxu0
      %1039 = vmatprep.mubr.f32.mxu0 0.0
      %1040 = vmatmul.mubr.f32.gmra.mrb[0].mxu0 %v935
      %v1041 = vpop.f32.mrb[0].mxu0
      %v1042 = vadd.f32 0.0, %v1041
      %v1043 = vpop.f32.mrb[0].mxu0
      %1044 = vdwg.mxu0
      %v1045 = vmul.f32 %v1007, 0.5
      %v1046 = vmul.f32 %v1012, 0.5
      %v1047 = vmul.f32 %v1017, 0.5
      %v1048 = vmul.f32 %v1022, 0.5
      %v1049 = vmul.f32 %v1027, 0.5
      %v1050 = vmul.f32 %v1032, 0.5
      %v1051 = vmul.f32 %v1037, 0.5
      %v1052 = vmul.f32 %v1042, 0.5
      %v1053 = vld [vmem:[%s10] sm:$0xf]
      %v1055 = vsel %vm548, %v1053, 0
      %1057 = vmatprep.subr.mxu0 0.0
      %1058 = vmatpush1.xpose.msra.mxu0 %v1055
      %1059 = vmatprep.subr.mxu0 0.0
      %1060 = vmatpush1.xpose.msra.mxu0 0.0
      %1061 = vmatprep.subr.mxu0 0.0
      %1062 = vmatpush1.xpose.msra.mxu0 0.0
      %1063 = vmatprep.subr.mxu0 0.0
      %1064 = vmatpush1.xpose.msra.mxu0 0.0
      %1065 = vmatprep.subr.mxu0 0.0
      %1066 = vmatpush1.xpose.msra.mxu0 0.0
      %1067 = vmatprep.subr.mxu0 0.0
      %1068 = vmatpush1.xpose.msra.mxu0 0.0
      %1069 = vmatprep.subr.mxu0 0.0
      %1070 = vmatpush1.xpose.msra.mxu0 0.0
      %1071 = vmatprep.subr.mxu0 0.0
      %1072 = vmatpush1.xpose.msra.mxu0 0.0
      %1073 = vmatprep.subr.mxu0 0.0
      %1074 = vmatpush1.xpose.msra.mxu0 0.0
      %1075 = vmatprep.subr.mxu0 0.0
      %1076 = vmatpush1.xpose.msra.mxu0 0.0
      %1077 = vmatprep.subr.mxu0 0.0
      %1078 = vmatpush1.xpose.msra.mxu0 0.0
      %1079 = vmatprep.subr.mxu0 0.0
      %1080 = vmatpush1.xpose.msra.mxu0 0.0
      %1081 = vmatprep.subr.mxu0 0.0
      %1082 = vmatpush1.xpose.msra.mxu0 0.0
      %1083 = vmatprep.subr.mxu0 0.0
      %1084 = vmatpush1.xpose.msra.mxu0 0.0
      %1085 = vmatprep.subr.mxu0 0.0
      %1086 = vmatpush1.xpose.msra.mxu0 0.0
      %1087 = vmatprep.subr.mxu0 0.0
      %1088 = vmatpush1.xpose.msra.mxu0 0.0
      %1089 = vmatprep.subr.mxu0 0.0
      %1090 = vmatpush1.xpose.msra.mxu0 0.0
      %1091 = vmatprep.subr.mxu0 0.0
      %1092 = vmatpush1.xpose.msra.mxu0 0.0
      %1093 = vmatprep.subr.mxu0 0.0
      %1094 = vmatpush1.xpose.msra.mxu0 0.0
      %1095 = vmatprep.subr.mxu0 0.0
      %1096 = vmatpush1.xpose.msra.mxu0 0.0
      %1097 = vmatprep.subr.mxu0 0.0
      %1098 = vmatpush1.xpose.msra.mxu0 0.0
      %1099 = vmatprep.subr.mxu0 0.0
      %1100 = vmatpush1.xpose.msra.mxu0 0.0
      %1101 = vmatprep.subr.mxu0 0.0
      %1102 = vmatpush1.xpose.msra.mxu0 0.0
      %1103 = vmatprep.subr.mxu0 0.0
      %1104 = vmatpush1.xpose.msra.mxu0 0.0
      %1105 = vmatprep.subr.mxu0 0.0
      %1106 = vmatpush1.xpose.msra.mxu0 0.0
      %1107 = vmatprep.subr.mxu0 0.0
      %1108 = vmatpush1.xpose.msra.mxu0 0.0
      %1109 = vmatprep.subr.mxu0 0.0
      %1110 = vmatpush1.xpose.msra.mxu0 0.0
      %1111 = vmatprep.subr.mxu0 0.0
      %1112 = vmatpush1.xpose.msra.mxu0 0.0
      %1113 = vmatprep.subr.mxu0 0.0
      %1114 = vmatpush1.xpose.msra.mxu0 0.0
      %1115 = vmatprep.subr.mxu0 0.0
      %1116 = vmatpush1.xpose.msra.mxu0 0.0
      %1117 = vmatprep.subr.mxu0 0.0
      %1118 = vmatpush1.xpose.msra.mxu0 0.0
      %1119 = vmatprep.subr.mxu0 0.0
      %1120 = vmatpush1.xpose.msra.mxu0 0.0
      %1121 = vmatprep.mubr.f32.mxu0 0.0
      %1122 = vmatmul.mubr.f32.gmra.mrb[0].mxu0 %v914
      %v1123 = vpop.f32.mrb[0].mxu0
      %v1124 = vadd.f32 0.0, %v1123
      %v1125 = vpop.f32.mrb[0].mxu0
      %1126 = vmatprep.mubr.f32.mxu0 0.0
      %1127 = vmatmul.mubr.f32.gmra.mrb[0].mxu0 %v917
      %v1128 = vpop.f32.mrb[0].mxu0
      %v1129 = vadd.f32 0.0, %v1128
      %v1130 = vpop.f32.mrb[0].mxu0
      %1131 = vmatprep.mubr.f32.mxu0 0.0
      %1132 = vmatmul.mubr.f32.gmra.mrb[0].mxu0 %v920
      %v1133 = vpop.f32.mrb[0].mxu0
      %v1134 = vadd.f32 0.0, %v1133
      %v1135 = vpop.f32.mrb[0].mxu0
      %1136 = vmatprep.mubr.f32.mxu0 0.0
      %1137 = vmatmul.mubr.f32.gmra.mrb[0].mxu0 %v923
      %v1138 = vpop.f32.mrb[0].mxu0
      %v1139 = vadd.f32 0.0, %v1138
      %v1140 = vpop.f32.mrb[0].mxu0
      %1141 = vmatprep.mubr.f32.mxu0 0.0
      %1142 = vmatmul.mubr.f32.gmra.mrb[0].mxu0 %v926
      %v1143 = vpop.f32.mrb[0].mxu0
      %v1144 = vadd.f32 0.0, %v1143
      %v1145 = vpop.f32.mrb[0].mxu0
      %1146 = vmatprep.mubr.f32.mxu0 0.0
      %1147 = vmatmul.mubr.f32.gmra.mrb[0].mxu0 %v929
      %v1148 = vpop.f32.mrb[0].mxu0
      %v1149 = vadd.f32 0.0, %v1148
      %v1150 = vpop.f32.mrb[0].mxu0
      %1151 = vmatprep.mubr.f32.mxu0 0.0
      %1152 = vmatmul.mubr.f32.gmra.mrb[0].mxu0 %v932
      %v1153 = vpop.f32.mrb[0].mxu0
      %v1154 = vadd.f32 0.0, %v1153
      %v1155 = vpop.f32.mrb[0].mxu0
      %1156 = vmatprep.mubr.f32.mxu0 0.0
      %1157 = vmatmul.mubr.f32.gmra.mrb[0].mxu0 %v935
      %v1158 = vpop.f32.mrb[0].mxu0
      %v1159 = vadd.f32 0.0, %v1158
      %v1160 = vpop.f32.mrb[0].mxu0
      %1161 = vdwg.mxu0
      %v1162 = vld [vmem:[%s11] sm:$0xf]
      %v1164 = vsel %vm548, %v1162, 0
      %1166 = vmatprep.subr.mxu0 0.0
      %1167 = vmatpush1.xpose.msra.mxu0 %v1164
      %1168 = vmatprep.subr.mxu0 0.0
      %1169 = vmatpush1.xpose.msra.mxu0 0.0
      %1170 = vmatprep.subr.mxu0 0.0
      %1171 = vmatpush1.xpose.msra.mxu0 0.0
      %1172 = vmatprep.subr.mxu0 0.0
      %1173 = vmatpush1.xpose.msra.mxu0 0.0
      %1174 = vmatprep.subr.mxu0 0.0
      %1175 = vmatpush1.xpose.msra.mxu0 0.0
      %1176 = vmatprep.subr.mxu0 0.0
      %1177 = vmatpush1.xpose.msra.mxu0 0.0
      %1178 = vmatprep.subr.mxu0 0.0
      %1179 = vmatpush1.xpose.msra.mxu0 0.0
      %1180 = vmatprep.subr.mxu0 0.0
      %1181 = vmatpush1.xpose.msra.mxu0 0.0
      %1182 = vmatprep.subr.mxu0 0.0
      %1183 = vmatpush1.xpose.msra.mxu0 0.0
      %1184 = vmatprep.subr.mxu0 0.0
      %1185 = vmatpush1.xpose.msra.mxu0 0.0
      %1186 = vmatprep.subr.mxu0 0.0
      %1187 = vmatpush1.xpose.msra.mxu0 0.0
      %1188 = vmatprep.subr.mxu0 0.0
      %1189 = vmatpush1.xpose.msra.mxu0 0.0
      %1190 = vmatprep.subr.mxu0 0.0
      %1191 = vmatpush1.xpose.msra.mxu0 0.0
      %1192 = vmatprep.subr.mxu0 0.0
      %1193 = vmatpush1.xpose.msra.mxu0 0.0
      %1194 = vmatprep.subr.mxu0 0.0
      %1195 = vmatpush1.xpose.msra.mxu0 0.0
      %1196 = vmatprep.subr.mxu0 0.0
      %1197 = vmatpush1.xpose.msra.mxu0 0.0
      %1198 = vmatprep.subr.mxu0 0.0
      %1199 = vmatpush1.xpose.msra.mxu0 0.0
      %1200 = vmatprep.subr.mxu0 0.0
      %1201 = vmatpush1.xpose.msra.mxu0 0.0
      %1202 = vmatprep.subr.mxu0 0.0
      %1203 = vmatpush1.xpose.msra.mxu0 0.0
      %1204 = vmatprep.subr.mxu0 0.0
      %1205 = vmatpush1.xpose.msra.mxu0 0.0
      %1206 = vmatprep.subr.mxu0 0.0
      %1207 = vmatpush1.xpose.msra.mxu0 0.0
      %1208 = vmatprep.subr.mxu0 0.0
      %1209 = vmatpush1.xpose.msra.mxu0 0.0
      %1210 = vmatprep.subr.mxu0 0.0
      %1211 = vmatpush1.xpose.msra.mxu0 0.0
      %1212 = vmatprep.subr.mxu0 0.0
      %1213 = vmatpush1.xpose.msra.mxu0 0.0
      %1214 = vmatprep.subr.mxu0 0.0
      %1215 = vmatpush1.xpose.msra.mxu0 0.0
      %1216 = vmatprep.subr.mxu0 0.0
      %1217 = vmatpush1.xpose.msra.mxu0 0.0
      %1218 = vmatprep.subr.mxu0 0.0
      %1219 = vmatpush1.xpose.msra.mxu0 0.0
      %1220 = vmatprep.subr.mxu0 0.0
      %1221 = vmatpush1.xpose.msra.mxu0 0.0
      %1222 = vmatprep.subr.mxu0 0.0
      %1223 = vmatpush1.xpose.msra.mxu0 0.0
      %1224 = vmatprep.subr.mxu0 0.0
      %1225 = vmatpush1.xpose.msra.mxu0 0.0
      %1226 = vmatprep.subr.mxu0 0.0
      %1227 = vmatpush1.xpose.msra.mxu0 0.0
      %1228 = vmatprep.subr.mxu0 0.0
      %1229 = vmatpush1.xpose.msra.mxu0 0.0
      %1230 = vmatprep.mubr.f32.mxu0 0.0
      %1231 = vmatmul.mubr.f32.gmra.mrb[0].mxu0 %v914
      %v1232 = vpop.f32.mrb[0].mxu0
      %v1233 = vadd.f32 0.0, %v1232
      %v1234 = vpop.f32.mrb[0].mxu0
      %1235 = vmatprep.mubr.f32.mxu0 0.0
      %1236 = vmatmul.mubr.f32.gmra.mrb[0].mxu0 %v917
      %v1237 = vpop.f32.mrb[0].mxu0
      %v1238 = vadd.f32 0.0, %v1237
      %v1239 = vpop.f32.mrb[0].mxu0
      %1240 = vmatprep.mubr.f32.mxu0 0.0
      %1241 = vmatmul.mubr.f32.gmra.mrb[0].mxu0 %v920
      %v1242 = vpop.f32.mrb[0].mxu0
      %v1243 = vadd.f32 0.0, %v1242
      %v1244 = vpop.f32.mrb[0].mxu0
      %1245 = vmatprep.mubr.f32.mxu0 0.0
      %1246 = vmatmul.mubr.f32.gmra.mrb[0].mxu0 %v923
      %v1247 = vpop.f32.mrb[0].mxu0
      %v1248 = vadd.f32 0.0, %v1247
      %v1249 = vpop.f32.mrb[0].mxu0
      %1250 = vmatprep.mubr.f32.mxu0 0.0
      %1251 = vmatmul.mubr.f32.gmra.mrb[0].mxu0 %v926
      %v1252 = vpop.f32.mrb[0].mxu0
      %v1253 = vadd.f32 0.0, %v1252
      %v1254 = vpop.f32.mrb[0].mxu0
      %1255 = vmatprep.mubr.f32.mxu0 0.0
      %1256 = vmatmul.mubr.f32.gmra.mrb[0].mxu0 %v929
      %v1257 = vpop.f32.mrb[0].mxu0
      %v1258 = vadd.f32 0.0, %v1257
      %v1259 = vpop.f32.mrb[0].mxu0
      %1260 = vmatprep.mubr.f32.mxu0 0.0
      %1261 = vmatmul.mubr.f32.gmra.mrb[0].mxu0 %v932
      %v1262 = vpop.f32.mrb[0].mxu0
      %v1263 = vadd.f32 0.0, %v1262
      %v1264 = vpop.f32.mrb[0].mxu0
      %1265 = vmatprep.mubr.f32.mxu0 0.0
      %1266 = vmatmul.mubr.f32.gmra.mrb[0].mxu0 %v935
      %v1267 = vpop.f32.mrb[0].mxu0
      %v1268 = vadd.f32 0.0, %v1267
      %v1269 = vpop.f32.mrb[0].mxu0
      %1270 = vdwg.mxu0
      %vm1271 = vcmask 31744
      %v1273 = vsel %vm1271, %v1045, 0
      %v1276 = vsel %vm1271, %v1046, 0
      %v1279 = vsel %vm1271, %v1047, 0
      %v1282 = vsel %vm1271, %v1048, 0
      %v1285 = vsel %vm1271, %v1049, 0
      %v1288 = vsel %vm1271, %v1050, 0
      %v1291 = vsel %vm1271, %v1051, 0
      %v1294 = vsel %vm1271, %v1052, 0
      %v1297 = vsel %vm1271, %v1124, 0
      %v1300 = vsel %vm1271, %v1129, 0
      %v1303 = vsel %vm1271, %v1134, 0
      %v1306 = vsel %vm1271, %v1139, 0
      %v1309 = vsel %vm1271, %v1144, 0
      %v1312 = vsel %vm1271, %v1149, 0
      %v1315 = vsel %vm1271, %v1154, 0
      %v1318 = vsel %vm1271, %v1159, 0
      %1320 = vmatprep.subr.mxu0 0.0
      %1321 = vmatpush1.xpose.msra.mxu0 %v1297
      %1322 = vmatprep.subr.mxu0 0.0
      %1323 = vmatpush1.xpose.msra.mxu0 %v1300
      %1324 = vmatprep.subr.mxu0 0.0
      %1325 = vmatpush1.xpose.msra.mxu0 %v1303
      %1326 = vmatprep.subr.mxu0 0.0
      %1327 = vmatpush1.xpose.msra.mxu0 %v1306
      %1328 = vmatprep.subr.mxu0 0.0
      %1329 = vmatpush1.xpose.msra.mxu0 %v1309
      %1330 = vmatprep.subr.mxu0 0.0
      %1331 = vmatpush1.xpose.msra.mxu0 %v1312
      %1332 = vmatprep.subr.mxu0 0.0
      %1333 = vmatpush1.xpose.msra.mxu0 %v1315
      %1334 = vmatprep.subr.mxu0 0.0
      %1335 = vmatpush1.xpose.msra.mxu0 %v1318
      %1336 = vmatprep.subr.mxu0 0.0
      %1337 = vmatpush1.xpose.msra.mxu0 0.0
      %1338 = vmatprep.subr.mxu0 0.0
      %1339 = vmatpush1.xpose.msra.mxu0 0.0
      %1340 = vmatprep.subr.mxu0 0.0
      %1341 = vmatpush1.xpose.msra.mxu0 0.0
      %1342 = vmatprep.subr.mxu0 0.0
      %1343 = vmatpush1.xpose.msra.mxu0 0.0
      %1344 = vmatprep.subr.mxu0 0.0
      %1345 = vmatpush1.xpose.msra.mxu0 0.0
      %1346 = vmatprep.subr.mxu0 0.0
      %1347 = vmatpush1.xpose.msra.mxu0 0.0
      %1348 = vmatprep.subr.mxu0 0.0
      %1349 = vmatpush1.xpose.msra.mxu0 0.0
      %1350 = vmatprep.subr.mxu0 0.0
      %1351 = vmatpush1.xpose.msra.mxu0 0.0
      %1352 = vmatprep.subr.mxu0 0.0
      %1353 = vmatpush1.xpose.msra.mxu0 0.0
      %1354 = vmatprep.subr.mxu0 0.0
      %1355 = vmatpush1.xpose.msra.mxu0 0.0
      %1356 = vmatprep.subr.mxu0 0.0
      %1357 = vmatpush1.xpose.msra.mxu0 0.0
      %1358 = vmatprep.subr.mxu0 0.0
      %1359 = vmatpush1.xpose.msra.mxu0 0.0
      %1360 = vmatprep.subr.mxu0 0.0
      %1361 = vmatpush1.xpose.msra.mxu0 0.0
      %1362 = vmatprep.subr.mxu0 0.0
      %1363 = vmatpush1.xpose.msra.mxu0 0.0
      %1364 = vmatprep.subr.mxu0 0.0
      %1365 = vmatpush1.xpose.msra.mxu0 0.0
      %1366 = vmatprep.subr.mxu0 0.0
      %1367 = vmatpush1.xpose.msra.mxu0 0.0
      %1368 = vmatprep.subr.mxu0 0.0
      %1369 = vmatpush1.xpose.msra.mxu0 0.0
      %1370 = vmatprep.subr.mxu0 0.0
      %1371 = vmatpush1.xpose.msra.mxu0 0.0
      %1372 = vmatprep.subr.mxu0 0.0
      %1373 = vmatpush1.xpose.msra.mxu0 0.0
      %1374 = vmatprep.subr.mxu0 0.0
      %1375 = vmatpush1.xpose.msra.mxu0 0.0
      %1376 = vmatprep.subr.mxu0 0.0
      %1377 = vmatpush1.xpose.msra.mxu0 0.0
      %1378 = vmatprep.subr.mxu0 0.0
      %1379 = vmatpush1.xpose.msra.mxu0 0.0
      %1380 = vmatprep.subr.mxu0 0.0
      %1381 = vmatpush1.xpose.msra.mxu0 0.0
      %1382 = vmatprep.subr.mxu0 0.0
      %1383 = vmatpush1.xpose.msra.mxu0 0.0
      %1384 = vmatprep.mubr.f32.mxu0 0.0
      %1385 = vmatmul.mubr.f32.gmra.mrb[0].mxu0 %v1273
      %v1386 = vpop.f32.mrb[0].mxu0
      %v1387 = vadd.f32 0.0, %v1386
      %v1388 = vpop.f32.mrb[0].mxu0
      %1389 = vmatprep.mubr.f32.mxu0 0.0
      %1390 = vmatmul.mubr.f32.gmra.mrb[0].mxu0 %v1276
      %v1391 = vpop.f32.mrb[0].mxu0
      %v1392 = vadd.f32 0.0, %v1391
      %v1393 = vpop.f32.mrb[0].mxu0
      %1394 = vmatprep.mubr.f32.mxu0 0.0
      %1395 = vmatmul.mubr.f32.gmra.mrb[0].mxu0 %v1279
      %v1396 = vpop.f32.mrb[0].mxu0
      %v1397 = vadd.f32 0.0, %v1396
      %v1398 = vpop.f32.mrb[0].mxu0
      %1399 = vmatprep.mubr.f32.mxu0 0.0
      %1400 = vmatmul.mubr.f32.gmra.mrb[0].mxu0 %v1282
      %v1401 = vpop.f32.mrb[0].mxu0
      %v1402 = vadd.f32 0.0, %v1401
      %v1403 = vpop.f32.mrb[0].mxu0
      %1404 = vmatprep.mubr.f32.mxu0 0.0
      %1405 = vmatmul.mubr.f32.gmra.mrb[0].mxu0 %v1285
      %v1406 = vpop.f32.mrb[0].mxu0
      %v1407 = vadd.f32 0.0, %v1406
      %v1408 = vpop.f32.mrb[0].mxu0
      %1409 = vmatprep.mubr.f32.mxu0 0.0
      %1410 = vmatmul.mubr.f32.gmra.mrb[0].mxu0 %v1288
      %v1411 = vpop.f32.mrb[0].mxu0
      %v1412 = vadd.f32 0.0, %v1411
      %v1413 = vpop.f32.mrb[0].mxu0
      %1414 = vmatprep.mubr.f32.mxu0 0.0
      %1415 = vmatmul.mubr.f32.gmra.mrb[0].mxu0 %v1291
      %v1416 = vpop.f32.mrb[0].mxu0
      %v1417 = vadd.f32 0.0, %v1416
      %v1418 = vpop.f32.mrb[0].mxu0
      %1419 = vmatprep.mubr.f32.mxu0 0.0
      %1420 = vmatmul.mubr.f32.gmra.mrb[0].mxu0 %v1294
      %v1421 = vpop.f32.mrb[0].mxu0
      %v1422 = vadd.f32 0.0, %v1421
      %v1423 = vpop.f32.mrb[0].mxu0
      %1424 = vdwg.mxu0
      %v1425 = vsel %vm664, %v1387, -inf
      %1426 = vmax.xlane.f32.xlu0 %v1425
      %v1427 = vpop.xlane.xlu0 %1426
      %v1428 = vsel %vm664, %v1392, -inf
      %1429 = vmax.xlane.f32.xlu0 %v1428
      %v1430 = vpop.xlane.xlu0 %1429
      %v1431 = vsel %vm664, %v1397, -inf
      %1432 = vmax.xlane.f32.xlu0 %v1431
      %v1433 = vpop.xlane.xlu0 %1432
      %v1434 = vsel %vm664, %v1402, -inf
      %1435 = vmax.xlane.f32.xlu0 %v1434
      %v1436 = vpop.xlane.xlu0 %1435
      %v1437 = vsel %vm664, %v1407, -inf
      %1438 = vmax.xlane.f32.xlu0 %v1437
      %v1439 = vpop.xlane.xlu0 %1438
      %v1440 = vsel %vm664, %v1412, -inf
      %1441 = vmax.xlane.f32.xlu0 %v1440
      %v1442 = vpop.xlane.xlu0 %1441
      %v1443 = vsel %vm664, %v1417, -inf
      %1444 = vmax.xlane.f32.xlu0 %v1443
      %v1445 = vpop.xlane.xlu0 %1444
      %v1446 = vsel %vm664, %v1422, -inf
      %1447 = vmax.xlane.f32.xlu0 %v1446
      %v1448 = vpop.xlane.xlu0 %1447
      %v1449 = vsub.f32 %v1387, %v1427
      %v1450 = vsub.f32 %v1392, %v1430
      %v1451 = vsub.f32 %v1397, %v1433
      %v1452 = vsub.f32 %v1402, %v1436
      %v1453 = vsub.f32 %v1407, %v1439
      %v1454 = vsub.f32 %v1412, %v1442
      %v1455 = vsub.f32 %v1417, %v1445
      %v1456 = vsub.f32 %v1422, %v1448
      %v1457 = vmul.f32 %v1449, 1.442695
      %v1458 = vpow.pop %v1457
      %v1459 = vmul.f32 %v1450, 1.442695
      %v1460 = vpow.pop %v1459
      %v1461 = vmul.f32 %v1451, 1.442695
      %v1462 = vpow.pop %v1461
      %v1463 = vmul.f32 %v1452, 1.442695
      %v1464 = vpow.pop %v1463
      %v1465 = vmul.f32 %v1453, 1.442695
      %v1466 = vpow.pop %v1465
      %v1467 = vmul.f32 %v1454, 1.442695
      %v1468 = vpow.pop %v1467
      %v1469 = vmul.f32 %v1455, 1.442695
      %v1470 = vpow.pop %v1469
      %v1471 = vmul.f32 %v1456, 1.442695
      %v1472 = vpow.pop %v1471
      %v1473 = vsel %vm664, %v1458, 0.0
      %1474 = vadd.xlane.f32.xlu0 %v1473
      %v1475 = vpop.xlane.xlu0 %1474
      %v1476 = vsel %vm664, %v1460, 0.0
      %1477 = vadd.xlane.f32.xlu0 %v1476
      %v1478 = vpop.xlane.xlu0 %1477
      %v1479 = vsel %vm664, %v1462, 0.0
      %1480 = vadd.xlane.f32.xlu0 %v1479
      %v1481 = vpop.xlane.xlu0 %1480
      %v1482 = vsel %vm664, %v1464, 0.0
      %1483 = vadd.xlane.f32.xlu0 %v1482
      %v1484 = vpop.xlane.xlu0 %1483
      %v1485 = vsel %vm664, %v1466, 0.0
      %1486 = vadd.xlane.f32.xlu0 %v1485
      %v1487 = vpop.xlane.xlu0 %1486
      %v1488 = vsel %vm664, %v1468, 0.0
      %1489 = vadd.xlane.f32.xlu0 %v1488
      %v1490 = vpop.xlane.xlu0 %1489
      %v1491 = vsel %vm664, %v1470, 0.0
      %1492 = vadd.xlane.f32.xlu0 %v1491
      %v1493 = vpop.xlane.xlu0 %1492
      %v1494 = vsel %vm664, %v1472, 0.0
      %1495 = vadd.xlane.f32.xlu0 %v1494
      %v1496 = vpop.xlane.xlu0 %1495
      %v1497 = vrcp.pop %v1475
      %v1498 = vrcp.pop %v1478
      %v1499 = vrcp.pop %v1481
      %v1500 = vrcp.pop %v1484
      %v1501 = vrcp.pop %v1487
      %v1502 = vrcp.pop %v1490
      %v1503 = vrcp.pop %v1493
      %v1504 = vrcp.pop %v1496
      %v1505 = vmul.f32 %v1458, %v1497
      %v1506 = vmul.f32 %v1460, %v1498
      %v1507 = vmul.f32 %v1462, %v1499
      %v1508 = vmul.f32 %v1464, %v1500
      %v1509 = vmul.f32 %v1466, %v1501
      %v1510 = vmul.f32 %v1468, %v1502
      %v1511 = vmul.f32 %v1470, %v1503
      %v1512 = vmul.f32 %v1472, %v1504
      %v1514 = vsel %vm664, %v1505, 0
      %v1517 = vsel %vm664, %v1506, 0
      %v1520 = vsel %vm664, %v1507, 0
      %v1523 = vsel %vm664, %v1508, 0
      %v1526 = vsel %vm664, %v1509, 0
      %v1529 = vsel %vm664, %v1510, 0
      %v1532 = vsel %vm664, %v1511, 0
      %v1535 = vsel %vm664, %v1512, 0
      %1537 = vmatprep.subr.mxu0 0.0
      %1538 = vmatpush1.msra.mxu0 %v1233
      %1539 = vmatprep.subr.mxu0 0.0
      %1540 = vmatpush1.msra.mxu0 %v1238
      %1541 = vmatprep.subr.mxu0 0.0
      %1542 = vmatpush1.msra.mxu0 %v1243
      %1543 = vmatprep.subr.mxu0 0.0
      %1544 = vmatpush1.msra.mxu0 %v1248
      %1545 = vmatprep.subr.mxu0 0.0
      %1546 = vmatpush1.msra.mxu0 %v1253
      %1547 = vmatprep.subr.mxu0 0.0
      %1548 = vmatpush1.msra.mxu0 %v1258
      %1549 = vmatprep.subr.mxu0 0.0
      %1550 = vmatpush1.msra.mxu0 %v1263
      %1551 = vmatprep.subr.mxu0 0.0
      %1552 = vmatpush1.msra.mxu0 %v1268
      %1553 = vmatprep.subr.mxu0 0.0
      %1554 = vmatpush1.msra.mxu0 0.0
      %1555 = vmatprep.subr.mxu0 0.0
      %1556 = vmatpush1.msra.mxu0 0.0
      %1557 = vmatprep.subr.mxu0 0.0
      %1558 = vmatpush1.msra.mxu0 0.0
      %1559 = vmatprep.subr.mxu0 0.0
      %1560 = vmatpush1.msra.mxu0 0.0
      %1561 = vmatprep.subr.mxu0 0.0
      %1562 = vmatpush1.msra.mxu0 0.0
      %1563 = vmatprep.subr.mxu0 0.0
      %1564 = vmatpush1.msra.mxu0 0.0
      %1565 = vmatprep.subr.mxu0 0.0
      %1566 = vmatpush1.msra.mxu0 0.0
      %1567 = vmatprep.subr.mxu0 0.0
      %1568 = vmatpush1.msra.mxu0 0.0
      %1569 = vmatprep.subr.mxu0 0.0
      %1570 = vmatpush1.msra.mxu0 0.0
      %1571 = vmatprep.subr.mxu0 0.0
      %1572 = vmatpush1.msra.mxu0 0.0
      %1573 = vmatprep.subr.mxu0 0.0
      %1574 = vmatpush1.msra.mxu0 0.0
      %1575 = vmatprep.subr.mxu0 0.0
      %1576 = vmatpush1.msra.mxu0 0.0
      %1577 = vmatprep.subr.mxu0 0.0
      %1578 = vmatpush1.msra.mxu0 0.0
      %1579 = vmatprep.subr.mxu0 0.0
      %1580 = vmatpush1.msra.mxu0 0.0
      %1581 = vmatprep.subr.mxu0 0.0
      %1582 = vmatpush1.msra.mxu0 0.0
      %1583 = vmatprep.subr.mxu0 0.0
      %1584 = vmatpush1.msra.mxu0 0.0
      %1585 = vmatprep.subr.mxu0 0.0
      %1586 = vmatpush1.msra.mxu0 0.0
      %1587 = vmatprep.subr.mxu0 0.0
      %1588 = vmatpush1.msra.mxu0 0.0
      %1589 = vmatprep.subr.mxu0 0.0
      %1590 = vmatpush1.msra.mxu0 0.0
      %1591 = vmatprep.subr.mxu0 0.0
      %1592 = vmatpush1.msra.mxu0 0.0
      %1593 = vmatprep.subr.mxu0 0.0
      %1594 = vmatpush1.msra.mxu0 0.0
      %1595 = vmatprep.subr.mxu0 0.0
      %1596 = vmatpush1.msra.mxu0 0.0
      %1597 = vmatprep.subr.mxu0 0.0
      %1598 = vmatpush1.msra.mxu0 0.0
      %1599 = vmatprep.subr.mxu0 0.0
      %1600 = vmatpush1.msra.mxu0 0.0
      %1601 = vmatprep.mubr.f32.mxu0 0.0
      %1602 = vmatmul.mubr.f32.gmra.mrb[0].mxu0 %v1514
      %v1603 = vpop.f32.mrb[0].mxu0
      %v1604 = vadd.f32 0.0, %v1603
      %v1605 = vpop.f32.mrb[0].mxu0
      %1606 = vmatprep.mubr.f32.mxu0 0.0
      %1607 = vmatmul.mubr.f32.gmra.mrb[0].mxu0 %v1517
      %v1608 = vpop.f32.mrb[0].mxu0
      %v1609 = vadd.f32 0.0, %v1608
      %v1610 = vpop.f32.mrb[0].mxu0
      %1611 = vmatprep.mubr.f32.mxu0 0.0
      %1612 = vmatmul.mubr.f32.gmra.mrb[0].mxu0 %v1520
      %v1613 = vpop.f32.mrb[0].mxu0
      %v1614 = vadd.f32 0.0, %v1613
      %v1615 = vpop.f32.mrb[0].mxu0
      %1616 = vmatprep.mubr.f32.mxu0 0.0
      %1617 = vmatmul.mubr.f32.gmra.mrb[0].mxu0 %v1523
      %v1618 = vpop.f32.mrb[0].mxu0
      %v1619 = vadd.f32 0.0, %v1618
      %v1620 = vpop.f32.mrb[0].mxu0
      %1621 = vmatprep.mubr.f32.mxu0 0.0
      %1622 = vmatmul.mubr.f32.gmra.mrb[0].mxu0 %v1526
      %v1623 = vpop.f32.mrb[0].mxu0
      %v1624 = vadd.f32 0.0, %v1623
      %v1625 = vpop.f32.mrb[0].mxu0
      %1626 = vmatprep.mubr.f32.mxu0 0.0
      %1627 = vmatmul.mubr.f32.gmra.mrb[0].mxu0 %v1529
      %v1628 = vpop.f32.mrb[0].mxu0
      %v1629 = vadd.f32 0.0, %v1628
      %v1630 = vpop.f32.mrb[0].mxu0
      %1631 = vmatprep.mubr.f32.mxu0 0.0
      %1632 = vmatmul.mubr.f32.gmra.mrb[0].mxu0 %v1532
      %v1633 = vpop.f32.mrb[0].mxu0
      %v1634 = vadd.f32 0.0, %v1633
      %v1635 = vpop.f32.mrb[0].mxu0
      %1636 = vmatprep.mubr.f32.mxu0 0.0
      %1637 = vmatmul.mubr.f32.gmra.mrb[0].mxu0 %v1535
      %v1638 = vpop.f32.mrb[0].mxu0
      %v1639 = vadd.f32 0.0, %v1638
      %v1640 = vpop.f32.mrb[0].mxu0
      %1641 = vdwg.mxu0
      %v1642 = vld [vmem:[%s12] sm:$0xff]
      %s1643 = scalar_lea.vmem %s9, 4
      %v1644 = vld [vmem:[%s1643] sm:$0xf]
      %v1646 = vsel %vm548, %v1644, 0
      %1648 = vmatprep.subr.mxu0 0.0
      %1649 = vmatpush1.xpose.msra.mxu0 %v1646
      %1650 = vmatprep.subr.mxu0 0.0
      %1651 = vmatpush1.xpose.msra.mxu0 0.0
      %1652 = vmatprep.subr.mxu0 0.0
      %1653 = vmatpush1.xpose.msra.mxu0 0.0
      %1654 = vmatprep.subr.mxu0 0.0
      %1655 = vmatpush1.xpose.msra.mxu0 0.0
      %1656 = vmatprep.subr.mxu0 0.0
      %1657 = vmatpush1.xpose.msra.mxu0 0.0
      %1658 = vmatprep.subr.mxu0 0.0
      %1659 = vmatpush1.xpose.msra.mxu0 0.0
      %1660 = vmatprep.subr.mxu0 0.0
      %1661 = vmatpush1.xpose.msra.mxu0 0.0
      %1662 = vmatprep.subr.mxu0 0.0
      %1663 = vmatpush1.xpose.msra.mxu0 0.0
      %1664 = vmatprep.subr.mxu0 0.0
      %1665 = vmatpush1.xpose.msra.mxu0 0.0
      %1666 = vmatprep.subr.mxu0 0.0
      %1667 = vmatpush1.xpose.msra.mxu0 0.0
      %1668 = vmatprep.subr.mxu0 0.0
      %1669 = vmatpush1.xpose.msra.mxu0 0.0
      %1670 = vmatprep.subr.mxu0 0.0
      %1671 = vmatpush1.xpose.msra.mxu0 0.0
      %1672 = vmatprep.subr.mxu0 0.0
      %1673 = vmatpush1.xpose.msra.mxu0 0.0
      %1674 = vmatprep.subr.mxu0 0.0
      %1675 = vmatpush1.xpose.msra.mxu0 0.0
      %1676 = vmatprep.subr.mxu0 0.0
      %1677 = vmatpush1.xpose.msra.mxu0 0.0
      %1678 = vmatprep.subr.mxu0 0.0
      %1679 = vmatpush1.xpose.msra.mxu0 0.0
      %1680 = vmatprep.subr.mxu0 0.0
      %1681 = vmatpush1.xpose.msra.mxu0 0.0
      %1682 = vmatprep.subr.mxu0 0.0
      %1683 = vmatpush1.xpose.msra.mxu0 0.0
      %1684 = vmatprep.subr.mxu0 0.0
      %1685 = vmatpush1.xpose.msra.mxu0 0.0
      %1686 = vmatprep.subr.mxu0 0.0
      %1687 = vmatpush1.xpose.msra.mxu0 0.0
      %1688 = vmatprep.subr.mxu0 0.0
      %1689 = vmatpush1.xpose.msra.mxu0 0.0
      %1690 = vmatprep.subr.mxu0 0.0
      %1691 = vmatpush1.xpose.msra.mxu0 0.0
      %1692 = vmatprep.subr.mxu0 0.0
      %1693 = vmatpush1.xpose.msra.mxu0 0.0
      %1694 = vmatprep.subr.mxu0 0.0
      %1695 = vmatpush1.xpose.msra.mxu0 0.0
      %1696 = vmatprep.subr.mxu0 0.0
      %1697 = vmatpush1.xpose.msra.mxu0 0.0
      %1698 = vmatprep.subr.mxu0 0.0
      %1699 = vmatpush1.xpose.msra.mxu0 0.0
      %1700 = vmatprep.subr.mxu0 0.0
      %1701 = vmatpush1.xpose.msra.mxu0 0.0
      %1702 = vmatprep.subr.mxu0 0.0
      %1703 = vmatpush1.xpose.msra.mxu0 0.0
      %1704 = vmatprep.subr.mxu0 0.0
      %1705 = vmatpush1.xpose.msra.mxu0 0.0
      %1706 = vmatprep.subr.mxu0 0.0
      %1707 = vmatpush1.xpose.msra.mxu0 0.0
      %1708 = vmatprep.subr.mxu0 0.0
      %1709 = vmatpush1.xpose.msra.mxu0 0.0
      %1710 = vmatprep.subr.mxu0 0.0
      %1711 = vmatpush1.xpose.msra.mxu0 0.0
      %1712 = vmatprep.mubr.f32.mxu0 0.0
      %1713 = vmatmul.mubr.f32.gmra.mrb[0].mxu0 %v914
      %v1714 = vpop.f32.mrb[0].mxu0
      %v1715 = vadd.f32 0.0, %v1714
      %v1716 = vpop.f32.mrb[0].mxu0
      %1717 = vmatprep.mubr.f32.mxu0 0.0
      %1718 = vmatmul.mubr.f32.gmra.mrb[0].mxu0 %v917
      %v1719 = vpop.f32.mrb[0].mxu0
      %v1720 = vadd.f32 0.0, %v1719
      %v1721 = vpop.f32.mrb[0].mxu0
      %1722 = vmatprep.mubr.f32.mxu0 0.0
      %1723 = vmatmul.mubr.f32.gmra.mrb[0].mxu0 %v920
      %v1724 = vpop.f32.mrb[0].mxu0
      %v1725 = vadd.f32 0.0, %v1724
      %v1726 = vpop.f32.mrb[0].mxu0
      %1727 = vmatprep.mubr.f32.mxu0 0.0
      %1728 = vmatmul.mubr.f32.gmra.mrb[0].mxu0 %v923
      %v1729 = vpop.f32.mrb[0].mxu0
      %v1730 = vadd.f32 0.0, %v1729
      %v1731 = vpop.f32.mrb[0].mxu0
      %1732 = vmatprep.mubr.f32.mxu0 0.0
      %1733 = vmatmul.mubr.f32.gmra.mrb[0].mxu0 %v926
      %v1734 = vpop.f32.mrb[0].mxu0
      %v1735 = vadd.f32 0.0, %v1734
      %v1736 = vpop.f32.mrb[0].mxu0
      %1737 = vmatprep.mubr.f32.mxu0 0.0
      %1738 = vmatmul.mubr.f32.gmra.mrb[0].mxu0 %v929
      %v1739 = vpop.f32.mrb[0].mxu0
      %v1740 = vadd.f32 0.0, %v1739
      %v1741 = vpop.f32.mrb[0].mxu0
      %1742 = vmatprep.mubr.f32.mxu0 0.0
      %1743 = vmatmul.mubr.f32.gmra.mrb[0].mxu0 %v932
      %v1744 = vpop.f32.mrb[0].mxu0
      %v1745 = vadd.f32 0.0, %v1744
      %v1746 = vpop.f32.mrb[0].mxu0
      %1747 = vmatprep.mubr.f32.mxu0 0.0
      %1748 = vmatmul.mubr.f32.gmra.mrb[0].mxu0 %v935
      %v1749 = vpop.f32.mrb[0].mxu0
      %v1750 = vadd.f32 0.0, %v1749
      %v1751 = vpop.f32.mrb[0].mxu0
      %1752 = vdwg.mxu0
      %v1753 = vmul.f32 %v1715, 0.5
      %v1754 = vmul.f32 %v1720, 0.5
      %v1755 = vmul.f32 %v1725, 0.5
      %v1756 = vmul.f32 %v1730, 0.5
      %v1757 = vmul.f32 %v1735, 0.5
      %v1758 = vmul.f32 %v1740, 0.5
      %v1759 = vmul.f32 %v1745, 0.5
      %v1760 = vmul.f32 %v1750, 0.5
      %s1761 = scalar_lea.vmem %s10, 4
      %v1762 = vld [vmem:[%s1761] sm:$0xf]
      %v1764 = vsel %vm548, %v1762, 0
      %1766 = vmatprep.subr.mxu0 0.0
      %1767 = vmatpush1.xpose.msra.mxu0 %v1764
      %1768 = vmatprep.subr.mxu0 0.0
      %1769 = vmatpush1.xpose.msra.mxu0 0.0
      %1770 = vmatprep.subr.mxu0 0.0
      %1771 = vmatpush1.xpose.msra.mxu0 0.0
      %1772 = vmatprep.subr.mxu0 0.0
      %1773 = vmatpush1.xpose.msra.mxu0 0.0
      %1774 = vmatprep.subr.mxu0 0.0
      %1775 = vmatpush1.xpose.msra.mxu0 0.0
      %1776 = vmatprep.subr.mxu0 0.0
      %1777 = vmatpush1.xpose.msra.mxu0 0.0
      %1778 = vmatprep.subr.mxu0 0.0
      %1779 = vmatpush1.xpose.msra.mxu0 0.0
      %1780 = vmatprep.subr.mxu0 0.0
      %1781 = vmatpush1.xpose.msra.mxu0 0.0
      %1782 = vmatprep.subr.mxu0 0.0
      %1783 = vmatpush1.xpose.msra.mxu0 0.0
      %1784 = vmatprep.subr.mxu0 0.0
      %1785 = vmatpush1.xpose.msra.mxu0 0.0
      %1786 = vmatprep.subr.mxu0 0.0
      %1787 = vmatpush1.xpose.msra.mxu0 0.0
      %1788 = vmatprep.subr.mxu0 0.0
      %1789 = vmatpush1.xpose.msra.mxu0 0.0
      %1790 = vmatprep.subr.mxu0 0.0
      %1791 = vmatpush1.xpose.msra.mxu0 0.0
      %1792 = vmatprep.subr.mxu0 0.0
      %1793 = vmatpush1.xpose.msra.mxu0 0.0
      %1794 = vmatprep.subr.mxu0 0.0
      %1795 = vmatpush1.xpose.msra.mxu0 0.0
      %1796 = vmatprep.subr.mxu0 0.0
      %1797 = vmatpush1.xpose.msra.mxu0 0.0
      %1798 = vmatprep.subr.mxu0 0.0
      %1799 = vmatpush1.xpose.msra.mxu0 0.0
      %1800 = vmatprep.subr.mxu0 0.0
      %1801 = vmatpush1.xpose.msra.mxu0 0.0
      %1802 = vmatprep.subr.mxu0 0.0
      %1803 = vmatpush1.xpose.msra.mxu0 0.0
      %1804 = vmatprep.subr.mxu0 0.0
      %1805 = vmatpush1.xpose.msra.mxu0 0.0
      %1806 = vmatprep.subr.mxu0 0.0
      %1807 = vmatpush1.xpose.msra.mxu0 0.0
      %1808 = vmatprep.subr.mxu0 0.0
      %1809 = vmatpush1.xpose.msra.mxu0 0.0
      %1810 = vmatprep.subr.mxu0 0.0
      %1811 = vmatpush1.xpose.msra.mxu0 0.0
      %1812 = vmatprep.subr.mxu0 0.0
      %1813 = vmatpush1.xpose.msra.mxu0 0.0
      %1814 = vmatprep.subr.mxu0 0.0
      %1815 = vmatpush1.xpose.msra.mxu0 0.0
      %1816 = vmatprep.subr.mxu0 0.0
      %1817 = vmatpush1.xpose.msra.mxu0 0.0
      %1818 = vmatprep.subr.mxu0 0.0
      %1819 = vmatpush1.xpose.msra.mxu0 0.0
      %1820 = vmatprep.subr.mxu0 0.0
      %1821 = vmatpush1.xpose.msra.mxu0 0.0
      %1822 = vmatprep.subr.mxu0 0.0
      %1823 = vmatpush1.xpose.msra.mxu0 0.0
      %1824 = vmatprep.subr.mxu0 0.0
      %1825 = vmatpush1.xpose.msra.mxu0 0.0
      %1826 = vmatprep.subr.mxu0 0.0
      %1827 = vmatpush1.xpose.msra.mxu0 0.0
      %1828 = vmatprep.subr.mxu0 0.0
      %1829 = vmatpush1.xpose.msra.mxu0 0.0
      %1830 = vmatprep.mubr.f32.mxu0 0.0
      %1831 = vmatmul.mubr.f32.gmra.mrb[0].mxu0 %v914
      %v1832 = vpop.f32.mrb[0].mxu0
      %v1833 = vadd.f32 0.0, %v1832
      %v1834 = vpop.f32.mrb[0].mxu0
      %1835 = vmatprep.mubr.f32.mxu0 0.0
      %1836 = vmatmul.mubr.f32.gmra.mrb[0].mxu0 %v917
      %v1837 = vpop.f32.mrb[0].mxu0
      %v1838 = vadd.f32 0.0, %v1837
      %v1839 = vpop.f32.mrb[0].mxu0
      %1840 = vmatprep.mubr.f32.mxu0 0.0
      %1841 = vmatmul.mubr.f32.gmra.mrb[0].mxu0 %v920
      %v1842 = vpop.f32.mrb[0].mxu0
      %v1843 = vadd.f32 0.0, %v1842
      %v1844 = vpop.f32.mrb[0].mxu0
      %1845 = vmatprep.mubr.f32.mxu0 0.0
      %1846 = vmatmul.mubr.f32.gmra.mrb[0].mxu0 %v923
      %v1847 = vpop.f32.mrb[0].mxu0
      %v1848 = vadd.f32 0.0, %v1847
      %v1849 = vpop.f32.mrb[0].mxu0
      %1850 = vmatprep.mubr.f32.mxu0 0.0
      %1851 = vmatmul.mubr.f32.gmra.mrb[0].mxu0 %v926
      %v1852 = vpop.f32.mrb[0].mxu0
      %v1853 = vadd.f32 0.0, %v1852
      %v1854 = vpop.f32.mrb[0].mxu0
      %1855 = vmatprep.mubr.f32.mxu0 0.0
      %1856 = vmatmul.mubr.f32.gmra.mrb[0].mxu0 %v929
      %v1857 = vpop.f32.mrb[0].mxu0
      %v1858 = vadd.f32 0.0, %v1857
      %v1859 = vpop.f32.mrb[0].mxu0
      %1860 = vmatprep.mubr.f32.mxu0 0.0
      %1861 = vmatmul.mubr.f32.gmra.mrb[0].mxu0 %v932
      %v1862 = vpop.f32.mrb[0].mxu0
      %v1863 = vadd.f32 0.0, %v1862
      %v1864 = vpop.f32.mrb[0].mxu0
      %1865 = vmatprep.mubr.f32.mxu0 0.0
      %1866 = vmatmul.mubr.f32.gmra.mrb[0].mxu0 %v935
      %v1867 = vpop.f32.mrb[0].mxu0
      %v1868 = vadd.f32 0.0, %v1867
      %v1869 = vpop.f32.mrb[0].mxu0
      %1870 = vdwg.mxu0
      %s1871 = scalar_lea.vmem %s11, 4
      %v1872 = vld [vmem:[%s1871] sm:$0xf]
      %v1874 = vsel %vm548, %v1872, 0
      %1876 = vmatprep.subr.mxu0 0.0
      %1877 = vmatpush1.xpose.msra.mxu0 %v1874
      %1878 = vmatprep.subr.mxu0 0.0
      %1879 = vmatpush1.xpose.msra.mxu0 0.0
      %1880 = vmatprep.subr.mxu0 0.0
      %1881 = vmatpush1.xpose.msra.mxu0 0.0
      %1882 = vmatprep.subr.mxu0 0.0
      %1883 = vmatpush1.xpose.msra.mxu0 0.0
      %1884 = vmatprep.subr.mxu0 0.0
      %1885 = vmatpush1.xpose.msra.mxu0 0.0
      %1886 = vmatprep.subr.mxu0 0.0
      %1887 = vmatpush1.xpose.msra.mxu0 0.0
      %1888 = vmatprep.subr.mxu0 0.0
      %1889 = vmatpush1.xpose.msra.mxu0 0.0
      %1890 = vmatprep.subr.mxu0 0.0
      %1891 = vmatpush1.xpose.msra.mxu0 0.0
      %1892 = vmatprep.subr.mxu0 0.0
      %1893 = vmatpush1.xpose.msra.mxu0 0.0
      %1894 = vmatprep.subr.mxu0 0.0
      %1895 = vmatpush1.xpose.msra.mxu0 0.0
      %1896 = vmatprep.subr.mxu0 0.0
      %1897 = vmatpush1.xpose.msra.mxu0 0.0
      %1898 = vmatprep.subr.mxu0 0.0
      %1899 = vmatpush1.xpose.msra.mxu0 0.0
      %1900 = vmatprep.subr.mxu0 0.0
      %1901 = vmatpush1.xpose.msra.mxu0 0.0
      %1902 = vmatprep.subr.mxu0 0.0
      %1903 = vmatpush1.xpose.msra.mxu0 0.0
      %1904 = vmatprep.subr.mxu0 0.0
      %1905 = vmatpush1.xpose.msra.mxu0 0.0
      %1906 = vmatprep.subr.mxu0 0.0
      %1907 = vmatpush1.xpose.msra.mxu0 0.0
      %1908 = vmatprep.subr.mxu0 0.0
      %1909 = vmatpush1.xpose.msra.mxu0 0.0
      %1910 = vmatprep.subr.mxu0 0.0
      %1911 = vmatpush1.xpose.msra.mxu0 0.0
      %1912 = vmatprep.subr.mxu0 0.0
      %1913 = vmatpush1.xpose.msra.mxu0 0.0
      %1914 = vmatprep.subr.mxu0 0.0
      %1915 = vmatpush1.xpose.msra.mxu0 0.0
      %1916 = vmatprep.subr.mxu0 0.0
      %1917 = vmatpush1.xpose.msra.mxu0 0.0
      %1918 = vmatprep.subr.mxu0 0.0
      %1919 = vmatpush1.xpose.msra.mxu0 0.0
      %1920 = vmatprep.subr.mxu0 0.0
      %1921 = vmatpush1.xpose.msra.mxu0 0.0
      %1922 = vmatprep.subr.mxu0 0.0
      %1923 = vmatpush1.xpose.msra.mxu0 0.0
      %1924 = vmatprep.subr.mxu0 0.0
      %1925 = vmatpush1.xpose.msra.mxu0 0.0
      %1926 = vmatprep.subr.mxu0 0.0
      %1927 = vmatpush1.xpose.msra.mxu0 0.0
      %1928 = vmatprep.subr.mxu0 0.0
      %1929 = vmatpush1.xpose.msra.mxu0 0.0
      %1930 = vmatprep.subr.mxu0 0.0
      %1931 = vmatpush1.xpose.msra.mxu0 0.0
      %1932 = vmatprep.subr.mxu0 0.0
      %1933 = vmatpush1.xpose.msra.mxu0 0.0
      %1934 = vmatprep.subr.mxu0 0.0
      %1935 = vmatpush1.xpose.msra.mxu0 0.0
      %1936 = vmatprep.subr.mxu0 0.0
      %1937 = vmatpush1.xpose.msra.mxu0 0.0
      %1938 = vmatprep.subr.mxu0 0.0
      %1939 = vmatpush1.xpose.msra.mxu0 0.0
      %1940 = vmatprep.mubr.f32.mxu0 0.0
      %1941 = vmatmul.mubr.f32.gmra.mrb[0].mxu0 %v914
      %v1942 = vpop.f32.mrb[0].mxu0
      %v1943 = vadd.f32 0.0, %v1942
      %v1944 = vpop.f32.mrb[0].mxu0
      %1945 = vmatprep.mubr.f32.mxu0 0.0
      %1946 = vmatmul.mubr.f32.gmra.mrb[0].mxu0 %v917
      %v1947 = vpop.f32.mrb[0].mxu0
      %v1948 = vadd.f32 0.0, %v1947
      %v1949 = vpop.f32.mrb[0].mxu0
      %1950 = vmatprep.mubr.f32.mxu0 0.0
      %1951 = vmatmul.mubr.f32.gmra.mrb[0].mxu0 %v920
      %v1952 = vpop.f32.mrb[0].mxu0
      %v1953 = vadd.f32 0.0, %v1952
      %v1954 = vpop.f32.mrb[0].mxu0
      %1955 = vmatprep.mubr.f32.mxu0 0.0
      %1956 = vmatmul.mubr.f32.gmra.mrb[0].mxu0 %v923
      %v1957 = vpop.f32.mrb[0].mxu0
      %v1958 = vadd.f32 0.0, %v1957
      %v1959 = vpop.f32.mrb[0].mxu0
      %1960 = vmatprep.mubr.f32.mxu0 0.0
      %1961 = vmatmul.mubr.f32.gmra.mrb[0].mxu0 %v926
      %v1962 = vpop.f32.mrb[0].mxu0
      %v1963 = vadd.f32 0.0, %v1962
      %v1964 = vpop.f32.mrb[0].mxu0
      %1965 = vmatprep.mubr.f32.mxu0 0.0
      %1966 = vmatmul.mubr.f32.gmra.mrb[0].mxu0 %v929
      %v1967 = vpop.f32.mrb[0].mxu0
      %v1968 = vadd.f32 0.0, %v1967
      %v1969 = vpop.f32.mrb[0].mxu0
      %1970 = vmatprep.mubr.f32.mxu0 0.0
      %1971 = vmatmul.mubr.f32.gmra.mrb[0].mxu0 %v932
      %v1972 = vpop.f32.mrb[0].mxu0
      %v1973 = vadd.f32 0.0, %v1972
      %v1974 = vpop.f32.mrb[0].mxu0
      %1975 = vmatprep.mubr.f32.mxu0 0.0
      %1976 = vmatmul.mubr.f32.gmra.mrb[0].mxu0 %v935
      %v1977 = vpop.f32.mrb[0].mxu0
      %v1978 = vadd.f32 0.0, %v1977
      %v1979 = vpop.f32.mrb[0].mxu0
      %1980 = vdwg.mxu0
      %v1982 = vsel %vm1271, %v1753, 0
      %v1985 = vsel %vm1271, %v1754, 0
      %v1988 = vsel %vm1271, %v1755, 0
      %v1991 = vsel %vm1271, %v1756, 0
      %v1994 = vsel %vm1271, %v1757, 0
      %v1997 = vsel %vm1271, %v1758, 0
      %v2000 = vsel %vm1271, %v1759, 0
      %v2003 = vsel %vm1271, %v1760, 0
      %v2006 = vsel %vm1271, %v1833, 0
      %v2009 = vsel %vm1271, %v1838, 0
      %v2012 = vsel %vm1271, %v1843, 0
      %v2015 = vsel %vm1271, %v1848, 0
      %v2018 = vsel %vm1271, %v1853, 0
      %v2021 = vsel %vm1271, %v1858, 0
      %v2024 = vsel %vm1271, %v1863, 0
      %v2027 = vsel %vm1271, %v1868, 0
      %2029 = vmatprep.subr.mxu0 0.0
      %2030 = vmatpush1.xpose.msra.mxu0 %v2006
      %2031 = vmatprep.subr.mxu0 0.0
      %2032 = vmatpush1.xpose.msra.mxu0 %v2009
      %2033 = vmatprep.subr.mxu0 0.0
      %2034 = vmatpush1.xpose.msra.mxu0 %v2012
      %2035 = vmatprep.subr.mxu0 0.0
      %2036 = vmatpush1.xpose.msra.mxu0 %v2015
      %2037 = vmatprep.subr.mxu0 0.0
      %2038 = vmatpush1.xpose.msra.mxu0 %v2018
      %2039 = vmatprep.subr.mxu0 0.0
      %2040 = vmatpush1.xpose.msra.mxu0 %v2021
      %2041 = vmatprep.subr.mxu0 0.0
      %2042 = vmatpush1.xpose.msra.mxu0 %v2024
      %2043 = vmatprep.subr.mxu0 0.0
      %2044 = vmatpush1.xpose.msra.mxu0 %v2027
      %2045 = vmatprep.subr.mxu0 0.0
      %2046 = vmatpush1.xpose.msra.mxu0 0.0
      %2047 = vmatprep.subr.mxu0 0.0
      %2048 = vmatpush1.xpose.msra.mxu0 0.0
      %2049 = vmatprep.subr.mxu0 0.0
      %2050 = vmatpush1.xpose.msra.mxu0 0.0
      %2051 = vmatprep.subr.mxu0 0.0
      %2052 = vmatpush1.xpose.msra.mxu0 0.0
      %2053 = vmatprep.subr.mxu0 0.0
      %2054 = vmatpush1.xpose.msra.mxu0 0.0
      %2055 = vmatprep.subr.mxu0 0.0
      %2056 = vmatpush1.xpose.msra.mxu0 0.0
      %2057 = vmatprep.subr.mxu0 0.0
      %2058 = vmatpush1.xpose.msra.mxu0 0.0
      %2059 = vmatprep.subr.mxu0 0.0
      %2060 = vmatpush1.xpose.msra.mxu0 0.0
      %2061 = vmatprep.subr.mxu0 0.0
      %2062 = vmatpush1.xpose.msra.mxu0 0.0
      %2063 = vmatprep.subr.mxu0 0.0
      %2064 = vmatpush1.xpose.msra.mxu0 0.0
      %2065 = vmatprep.subr.mxu0 0.0
      %2066 = vmatpush1.xpose.msra.mxu0 0.0
      %2067 = vmatprep.subr.mxu0 0.0
      %2068 = vmatpush1.xpose.msra.mxu0 0.0
      %2069 = vmatprep.subr.mxu0 0.0
      %2070 = vmatpush1.xpose.msra.mxu0 0.0
      %2071 = vmatprep.subr.mxu0 0.0
      %2072 = vmatpush1.xpose.msra.mxu0 0.0
      %2073 = vmatprep.subr.mxu0 0.0
      %2074 = vmatpush1.xpose.msra.mxu0 0.0
      %2075 = vmatprep.subr.mxu0 0.0
      %2076 = vmatpush1.xpose.msra.mxu0 0.0
      %2077 = vmatprep.subr.mxu0 0.0
      %2078 = vmatpush1.xpose.msra.mxu0 0.0
      %2079 = vmatprep.subr.mxu0 0.0
      %2080 = vmatpush1.xpose.msra.mxu0 0.0
      %2081 = vmatprep.subr.mxu0 0.0
      %2082 = vmatpush1.xpose.msra.mxu0 0.0
      %2083 = vmatprep.subr.mxu0 0.0
      %2084 = vmatpush1.xpose.msra.mxu0 0.0
      %2085 = vmatprep.subr.mxu0 0.0
      %2086 = vmatpush1.xpose.msra.mxu0 0.0
      %2087 = vmatprep.subr.mxu0 0.0
      %2088 = vmatpush1.xpose.msra.mxu0 0.0
      %2089 = vmatprep.subr.mxu0 0.0
      %2090 = vmatpush1.xpose.msra.mxu0 0.0
      %2091 = vmatprep.subr.mxu0 0.0
      %2092 = vmatpush1.xpose.msra.mxu0 0.0
      %2093 = vmatprep.mubr.f32.mxu0 0.0
      %2094 = vmatmul.mubr.f32.gmra.mrb[0].mxu0 %v1982
      %v2095 = vpop.f32.mrb[0].mxu0
      %v2096 = vadd.f32 0.0, %v2095
      %v2097 = vpop.f32.mrb[0].mxu0
      %2098 = vmatprep.mubr.f32.mxu0 0.0
      %2099 = vmatmul.mubr.f32.gmra.mrb[0].mxu0 %v1985
      %v2100 = vpop.f32.mrb[0].mxu0
      %v2101 = vadd.f32 0.0, %v2100
      %v2102 = vpop.f32.mrb[0].mxu0
      %2103 = vmatprep.mubr.f32.mxu0 0.0
      %2104 = vmatmul.mubr.f32.gmra.mrb[0].mxu0 %v1988
      %v2105 = vpop.f32.mrb[0].mxu0
      %v2106 = vadd.f32 0.0, %v2105
      %v2107 = vpop.f32.mrb[0].mxu0
      %2108 = vmatprep.mubr.f32.mxu0 0.0
      %2109 = vmatmul.mubr.f32.gmra.mrb[0].mxu0 %v1991
      %v2110 = vpop.f32.mrb[0].mxu0
      %v2111 = vadd.f32 0.0, %v2110
      %v2112 = vpop.f32.mrb[0].mxu0
      %2113 = vmatprep.mubr.f32.mxu0 0.0
      %2114 = vmatmul.mubr.f32.gmra.mrb[0].mxu0 %v1994
      %v2115 = vpop.f32.mrb[0].mxu0
      %v2116 = vadd.f32 0.0, %v2115
      %v2117 = vpop.f32.mrb[0].mxu0
      %2118 = vmatprep.mubr.f32.mxu0 0.0
      %2119 = vmatmul.mubr.f32.gmra.mrb[0].mxu0 %v1997
      %v2120 = vpop.f32.mrb[0].mxu0
      %v2121 = vadd.f32 0.0, %v2120
      %v2122 = vpop.f32.mrb[0].mxu0
      %2123 = vmatprep.mubr.f32.mxu0 0.0
      %2124 = vmatmul.mubr.f32.gmra.mrb[0].mxu0 %v2000
      %v2125 = vpop.f32.mrb[0].mxu0
      %v2126 = vadd.f32 0.0, %v2125
      %v2127 = vpop.f32.mrb[0].mxu0
      %2128 = vmatprep.mubr.f32.mxu0 0.0
      %2129 = vmatmul.mubr.f32.gmra.mrb[0].mxu0 %v2003
      %v2130 = vpop.f32.mrb[0].mxu0
      %v2131 = vadd.f32 0.0, %v2130
      %v2132 = vpop.f32.mrb[0].mxu0
      %2133 = vdwg.mxu0
      %v2134 = vsel %vm664, %v2096, -inf
      %2135 = vmax.xlane.f32.xlu0 %v2134
      %v2136 = vpop.xlane.xlu0 %2135
      %v2137 = vsel %vm664, %v2101, -inf
      %2138 = vmax.xlane.f32.xlu0 %v2137
      %v2139 = vpop.xlane.xlu0 %2138
      %v2140 = vsel %vm664, %v2106, -inf
      %2141 = vmax.xlane.f32.xlu0 %v2140
      %v2142 = vpop.xlane.xlu0 %2141
      %v2143 = vsel %vm664, %v2111, -inf
      %2144 = vmax.xlane.f32.xlu0 %v2143
      %v2145 = vpop.xlane.xlu0 %2144
      %v2146 = vsel %vm664, %v2116, -inf
      %2147 = vmax.xlane.f32.xlu0 %v2146
      %v2148 = vpop.xlane.xlu0 %2147
      %v2149 = vsel %vm664, %v2121, -inf
      %2150 = vmax.xlane.f32.xlu0 %v2149
      %v2151 = vpop.xlane.xlu0 %2150
      %v2152 = vsel %vm664, %v2126, -inf
      %2153 = vmax.xlane.f32.xlu0 %v2152
      %v2154 = vpop.xlane.xlu0 %2153
      %v2155 = vsel %vm664, %v2131, -inf
      %2156 = vmax.xlane.f32.xlu0 %v2155
      %v2157 = vpop.xlane.xlu0 %2156
      %v2158 = vsub.f32 %v2096, %v2136
      %v2159 = vsub.f32 %v2101, %v2139
      %v2160 = vsub.f32 %v2106, %v2142
      %v2161 = vsub.f32 %v2111, %v2145
      %v2162 = vsub.f32 %v2116, %v2148
      %v2163 = vsub.f32 %v2121, %v2151
      %v2164 = vsub.f32 %v2126, %v2154
      %v2165 = vsub.f32 %v2131, %v2157
      %v2166 = vmul.f32 %v2158, 1.442695
      %v2167 = vpow.pop %v2166
      %v2168 = vmul.f32 %v2159, 1.442695
      %v2169 = vpow.pop %v2168
      %v2170 = vmul.f32 %v2160, 1.442695
      %v2171 = vpow.pop %v2170
      %v2172 = vmul.f32 %v2161, 1.442695
      %v2173 = vpow.pop %v2172
      %v2174 = vmul.f32 %v2162, 1.442695
      %v2175 = vpow.pop %v2174
      %v2176 = vmul.f32 %v2163, 1.442695
      %v2177 = vpow.pop %v2176
      %v2178 = vmul.f32 %v2164, 1.442695
      %v2179 = vpow.pop %v2178
      %v2180 = vmul.f32 %v2165, 1.442695
      %v2181 = vpow.pop %v2180
      %v2182 = vsel %vm664, %v2167, 0.0
      %2183 = vadd.xlane.f32.xlu0 %v2182
      %v2184 = vpop.xlane.xlu0 %2183
      %v2185 = vsel %vm664, %v2169, 0.0
      %2186 = vadd.xlane.f32.xlu0 %v2185
      %v2187 = vpop.xlane.xlu0 %2186
      %v2188 = vsel %vm664, %v2171, 0.0
      %2189 = vadd.xlane.f32.xlu0 %v2188
      %v2190 = vpop.xlane.xlu0 %2189
      %v2191 = vsel %vm664, %v2173, 0.0
      %2192 = vadd.xlane.f32.xlu0 %v2191
      %v2193 = vpop.xlane.xlu0 %2192
      %v2194 = vsel %vm664, %v2175, 0.0
      %2195 = vadd.xlane.f32.xlu0 %v2194
      %v2196 = vpop.xlane.xlu0 %2195
      %v2197 = vsel %vm664, %v2177, 0.0
      %2198 = vadd.xlane.f32.xlu0 %v2197
      %v2199 = vpop.xlane.xlu0 %2198
      %v2200 = vsel %vm664, %v2179, 0.0
      %2201 = vadd.xlane.f32.xlu0 %v2200
      %v2202 = vpop.xlane.xlu0 %2201
      %v2203 = vsel %vm664, %v2181, 0.0
      %2204 = vadd.xlane.f32.xlu0 %v2203
      %v2205 = vpop.xlane.xlu0 %2204
      %v2206 = vrcp.pop %v2184
      %v2207 = vrcp.pop %v2187
      %v2208 = vrcp.pop %v2190
      %v2209 = vrcp.pop %v2193
      %v2210 = vrcp.pop %v2196
      %v2211 = vrcp.pop %v2199
      %v2212 = vrcp.pop %v2202
      %v2213 = vrcp.pop %v2205
      %v2214 = vmul.f32 %v2167, %v2206
      %v2215 = vmul.f32 %v2169, %v2207
      %v2216 = vmul.f32 %v2171, %v2208
      %v2217 = vmul.f32 %v2173, %v2209
      %v2218 = vmul.f32 %v2175, %v2210
      %v2219 = vmul.f32 %v2177, %v2211
      %v2220 = vmul.f32 %v2179, %v2212
      %v2221 = vmul.f32 %v2181, %v2213
      %v2223 = vsel %vm664, %v2214, 0
      %v2226 = vsel %vm664, %v2215, 0
      %v2229 = vsel %vm664, %v2216, 0
      %v2232 = vsel %vm664, %v2217, 0
      %v2235 = vsel %vm664, %v2218, 0
      %v2238 = vsel %vm664, %v2219, 0
      %v2241 = vsel %vm664, %v2220, 0
      %v2244 = vsel %vm664, %v2221, 0
      %2246 = vmatprep.subr.mxu0 0.0
      %2247 = vmatpush1.msra.mxu0 %v1943
      %2248 = vmatprep.subr.mxu0 0.0
      %2249 = vmatpush1.msra.mxu0 %v1948
      %2250 = vmatprep.subr.mxu0 0.0
      %2251 = vmatpush1.msra.mxu0 %v1953
      %2252 = vmatprep.subr.mxu0 0.0
      %2253 = vmatpush1.msra.mxu0 %v1958
      %2254 = vmatprep.subr.mxu0 0.0
      %2255 = vmatpush1.msra.mxu0 %v1963
      %2256 = vmatprep.subr.mxu0 0.0
      %2257 = vmatpush1.msra.mxu0 %v1968
      %2258 = vmatprep.subr.mxu0 0.0
      %2259 = vmatpush1.msra.mxu0 %v1973
      %2260 = vmatprep.subr.mxu0 0.0
      %2261 = vmatpush1.msra.mxu0 %v1978
      %2262 = vmatprep.subr.mxu0 0.0
      %2263 = vmatpush1.msra.mxu0 0.0
      %2264 = vmatprep.subr.mxu0 0.0
      %2265 = vmatpush1.msra.mxu0 0.0
      %2266 = vmatprep.subr.mxu0 0.0
      %2267 = vmatpush1.msra.mxu0 0.0
      %2268 = vmatprep.subr.mxu0 0.0
      %2269 = vmatpush1.msra.mxu0 0.0
      %2270 = vmatprep.subr.mxu0 0.0
      %2271 = vmatpush1.msra.mxu0 0.0
      %2272 = vmatprep.subr.mxu0 0.0
      %2273 = vmatpush1.msra.mxu0 0.0
      %2274 = vmatprep.subr.mxu0 0.0
      %2275 = vmatpush1.msra.mxu0 0.0
      %2276 = vmatprep.subr.mxu0 0.0
      %2277 = vmatpush1.msra.mxu0 0.0
      %2278 = vmatprep.subr.mxu0 0.0
      %2279 = vmatpush1.msra.mxu0 0.0
      %2280 = vmatprep.subr.mxu0 0.0
      %2281 = vmatpush1.msra.mxu0 0.0
      %2282 = vmatprep.subr.mxu0 0.0
      %2283 = vmatpush1.msra.mxu0 0.0
      %2284 = vmatprep.subr.mxu0 0.0
      %2285 = vmatpush1.msra.mxu0 0.0
      %2286 = vmatprep.subr.mxu0 0.0
      %2287 = vmatpush1.msra.mxu0 0.0
      %2288 = vmatprep.subr.mxu0 0.0
      %2289 = vmatpush1.msra.mxu0 0.0
      %2290 = vmatprep.subr.mxu0 0.0
      %2291 = vmatpush1.msra.mxu0 0.0
      %2292 = vmatprep.subr.mxu0 0.0
      %2293 = vmatpush1.msra.mxu0 0.0
      %2294 = vmatprep.subr.mxu0 0.0
      %2295 = vmatpush1.msra.mxu0 0.0
      %2296 = vmatprep.subr.mxu0 0.0
      %2297 = vmatpush1.msra.mxu0 0.0
      %2298 = vmatprep.subr.mxu0 0.0
      %2299 = vmatpush1.msra.mxu0 0.0
      %2300 = vmatprep.subr.mxu0 0.0
      %2301 = vmatpush1.msra.mxu0 0.0
      %2302 = vmatprep.subr.mxu0 0.0
      %2303 = vmatpush1.msra.mxu0 0.0
      %2304 = vmatprep.subr.mxu0 0.0
      %2305 = vmatpush1.msra.mxu0 0.0
      %2306 = vmatprep.subr.mxu0 0.0
      %2307 = vmatpush1.msra.mxu0 0.0
      %2308 = vmatprep.subr.mxu0 0.0
      %2309 = vmatpush1.msra.mxu0 0.0
      %2310 = vmatprep.mubr.f32.mxu0 0.0
      %2311 = vmatmul.mubr.f32.gmra.mrb[0].mxu0 %v2223
      %v2312 = vpop.f32.mrb[0].mxu0
      %v2313 = vadd.f32 0.0, %v2312
      %v2314 = vpop.f32.mrb[0].mxu0
      %2315 = vmatprep.mubr.f32.mxu0 0.0
      %2316 = vmatmul.mubr.f32.gmra.mrb[0].mxu0 %v2226
      %v2317 = vpop.f32.mrb[0].mxu0
      %v2318 = vadd.f32 0.0, %v2317
      %v2319 = vpop.f32.mrb[0].mxu0
      %2320 = vmatprep.mubr.f32.mxu0 0.0
      %2321 = vmatmul.mubr.f32.gmra.mrb[0].mxu0 %v2229
      %v2322 = vpop.f32.mrb[0].mxu0
      %v2323 = vadd.f32 0.0, %v2322
      %v2324 = vpop.f32.mrb[0].mxu0
      %2325 = vmatprep.mubr.f32.mxu0 0.0
      %2326 = vmatmul.mubr.f32.gmra.mrb[0].mxu0 %v2232
      %v2327 = vpop.f32.mrb[0].mxu0
      %v2328 = vadd.f32 0.0, %v2327
      %v2329 = vpop.f32.mrb[0].mxu0
      %2330 = vmatprep.mubr.f32.mxu0 0.0
      %2331 = vmatmul.mubr.f32.gmra.mrb[0].mxu0 %v2235
      %v2332 = vpop.f32.mrb[0].mxu0
      %v2333 = vadd.f32 0.0, %v2332
      %v2334 = vpop.f32.mrb[0].mxu0
      %2335 = vmatprep.mubr.f32.mxu0 0.0
      %2336 = vmatmul.mubr.f32.gmra.mrb[0].mxu0 %v2238
      %v2337 = vpop.f32.mrb[0].mxu0
      %v2338 = vadd.f32 0.0, %v2337
      %v2339 = vpop.f32.mrb[0].mxu0
      %2340 = vmatprep.mubr.f32.mxu0 0.0
      %2341 = vmatmul.mubr.f32.gmra.mrb[0].mxu0 %v2241
      %v2342 = vpop.f32.mrb[0].mxu0
      %v2343 = vadd.f32 0.0, %v2342
      %v2344 = vpop.f32.mrb[0].mxu0
      %2345 = vmatprep.mubr.f32.mxu0 0.0
      %2346 = vmatmul.mubr.f32.gmra.mrb[0].mxu0 %v2244
      %v2347 = vpop.f32.mrb[0].mxu0
      %v2348 = vadd.f32 0.0, %v2347
      %v2349 = vpop.f32.mrb[0].mxu0
      %2350 = vdwg.mxu0
      %s2351 = scalar_lea.vmem %s12, 8
      %v2352 = vld [vmem:[%s2351] sm:$0xff]
      %v2354 = vsel %vm1271, %v2352, 0
      %v2357 = vsel %vm1271, %v2313, 0
      %v2360 = vsel %vm1271, %v2318, 0
      %v2363 = vsel %vm1271, %v2323, 0
      %v2366 = vsel %vm1271, %v2328, 0
      %v2369 = vsel %vm1271, %v2333, 0
      %v2372 = vsel %vm1271, %v2338, 0
      %v2375 = vsel %vm1271, %v2343, 0
      %v2378 = vsel %vm1271, %v2348, 0
      %2380 = vmatprep.subr.mxu0 0.0
      %2381 = vmatpush1.xpose.msra.mxu0 %v2357
      %2382 = vmatprep.subr.mxu0 0.0
      %2383 = vmatpush1.xpose.msra.mxu0 %v2360
      %2384 = vmatprep.subr.mxu0 0.0
      %2385 = vmatpush1.xpose.msra.mxu0 %v2363
      %2386 = vmatprep.subr.mxu0 0.0
      %2387 = vmatpush1.xpose.msra.mxu0 %v2366
      %2388 = vmatprep.subr.mxu0 0.0
      %2389 = vmatpush1.xpose.msra.mxu0 %v2369
      %2390 = vmatprep.subr.mxu0 0.0
      %2391 = vmatpush1.xpose.msra.mxu0 %v2372
      %2392 = vmatprep.subr.mxu0 0.0
      %2393 = vmatpush1.xpose.msra.mxu0 %v2375
      %2394 = vmatprep.subr.mxu0 0.0
      %2395 = vmatpush1.xpose.msra.mxu0 %v2378
      %2396 = vmatprep.subr.mxu0 0.0
      %2397 = vmatpush1.xpose.msra.mxu0 0.0
      %2398 = vmatprep.subr.mxu0 0.0
      %2399 = vmatpush1.xpose.msra.mxu0 0.0
      %2400 = vmatprep.subr.mxu0 0.0
      %2401 = vmatpush1.xpose.msra.mxu0 0.0
      %2402 = vmatprep.subr.mxu0 0.0
      %2403 = vmatpush1.xpose.msra.mxu0 0.0
      %2404 = vmatprep.subr.mxu0 0.0
      %2405 = vmatpush1.xpose.msra.mxu0 0.0
      %2406 = vmatprep.subr.mxu0 0.0
      %2407 = vmatpush1.xpose.msra.mxu0 0.0
      %2408 = vmatprep.subr.mxu0 0.0
      %2409 = vmatpush1.xpose.msra.mxu0 0.0
      %2410 = vmatprep.subr.mxu0 0.0
      %2411 = vmatpush1.xpose.msra.mxu0 0.0
      %2412 = vmatprep.subr.mxu0 0.0
      %2413 = vmatpush1.xpose.msra.mxu0 0.0
      %2414 = vmatprep.subr.mxu0 0.0
      %2415 = vmatpush1.xpose.msra.mxu0 0.0
      %2416 = vmatprep.subr.mxu0 0.0
      %2417 = vmatpush1.xpose.msra.mxu0 0.0
      %2418 = vmatprep.subr.mxu0 0.0
      %2419 = vmatpush1.xpose.msra.mxu0 0.0
      %2420 = vmatprep.subr.mxu0 0.0
      %2421 = vmatpush1.xpose.msra.mxu0 0.0
      %2422 = vmatprep.subr.mxu0 0.0
      %2423 = vmatpush1.xpose.msra.mxu0 0.0
      %2424 = vmatprep.subr.mxu0 0.0
      %2425 = vmatpush1.xpose.msra.mxu0 0.0
      %2426 = vmatprep.subr.mxu0 0.0
      %2427 = vmatpush1.xpose.msra.mxu0 0.0
      %2428 = vmatprep.subr.mxu0 0.0
      %2429 = vmatpush1.xpose.msra.mxu0 0.0
      %2430 = vmatprep.subr.mxu0 0.0
      %2431 = vmatpush1.xpose.msra.mxu0 0.0
      %2432 = vmatprep.subr.mxu0 0.0
      %2433 = vmatpush1.xpose.msra.mxu0 0.0
      %2434 = vmatprep.subr.mxu0 0.0
      %2435 = vmatpush1.xpose.msra.mxu0 0.0
      %2436 = vmatprep.subr.mxu0 0.0
      %2437 = vmatpush1.xpose.msra.mxu0 0.0
      %2438 = vmatprep.subr.mxu0 0.0
      %2439 = vmatpush1.xpose.msra.mxu0 0.0
      %2440 = vmatprep.subr.mxu0 0.0
      %2441 = vmatpush1.xpose.msra.mxu0 0.0
      %2442 = vmatprep.subr.mxu0 0.0
      %2443 = vmatpush1.xpose.msra.mxu0 0.0
      %2444 = vmatprep.mubr.f32.mxu0 0.0
      %2445 = vmatmul.mubr.f32.gmra.mrb[0].mxu0 %v2354
      %v2446 = vpop.f32.mrb[0].mxu0
      %v2447 = vadd.f32 0.0, %v2446
      %v2448 = vpop.f32.mrb[0].mxu0
      %2449 = vdwg.mxu0
      %v2451 = vsel %vm1271, %v1642, 0
      %v2454 = vsel %vm1271, %v1604, 0
      %v2457 = vsel %vm1271, %v1609, 0
      %v2460 = vsel %vm1271, %v1614, 0
      %v2463 = vsel %vm1271, %v1619, 0
      %v2466 = vsel %vm1271, %v1624, 0
      %v2469 = vsel %vm1271, %v1629, 0
      %v2472 = vsel %vm1271, %v1634, 0
      %v2475 = vsel %vm1271, %v1639, 0
      %2477 = vmatprep.subr.mxu0 0.0
      %2478 = vmatpush1.xpose.msra.mxu0 %v2454
      %2479 = vmatprep.subr.mxu0 0.0
      %2480 = vmatpush1.xpose.msra.mxu0 %v2457
      %2481 = vmatprep.subr.mxu0 0.0
      %2482 = vmatpush1.xpose.msra.mxu0 %v2460
      %2483 = vmatprep.subr.mxu0 0.0
      %2484 = vmatpush1.xpose.msra.mxu0 %v2463
      %2485 = vmatprep.subr.mxu0 0.0
      %2486 = vmatpush1.xpose.msra.mxu0 %v2466
      %2487 = vmatprep.subr.mxu0 0.0
      %2488 = vmatpush1.xpose.msra.mxu0 %v2469
      %2489 = vmatprep.subr.mxu0 0.0
      %2490 = vmatpush1.xpose.msra.mxu0 %v2472
      %2491 = vmatprep.subr.mxu0 0.0
      %2492 = vmatpush1.xpose.msra.mxu0 %v2475
      %2493 = vmatprep.subr.mxu0 0.0
      %2494 = vmatpush1.xpose.msra.mxu0 0.0
      %2495 = vmatprep.subr.mxu0 0.0
      %2496 = vmatpush1.xpose.msra.mxu0 0.0
      %2497 = vmatprep.subr.mxu0 0.0
      %2498 = vmatpush1.xpose.msra.mxu0 0.0
      %2499 = vmatprep.subr.mxu0 0.0
      %2500 = vmatpush1.xpose.msra.mxu0 0.0
      %2501 = vmatprep.subr.mxu0 0.0
      %2502 = vmatpush1.xpose.msra.mxu0 0.0
      %2503 = vmatprep.subr.mxu0 0.0
      %2504 = vmatpush1.xpose.msra.mxu0 0.0
      %2505 = vmatprep.subr.mxu0 0.0
      %2506 = vmatpush1.xpose.msra.mxu0 0.0
      %2507 = vmatprep.subr.mxu0 0.0
      %2508 = vmatpush1.xpose.msra.mxu0 0.0
      %2509 = vmatprep.subr.mxu0 0.0
      %2510 = vmatpush1.xpose.msra.mxu0 0.0
      %2511 = vmatprep.subr.mxu0 0.0
      %2512 = vmatpush1.xpose.msra.mxu0 0.0
      %2513 = vmatprep.subr.mxu0 0.0
      %2514 = vmatpush1.xpose.msra.mxu0 0.0
      %2515 = vmatprep.subr.mxu0 0.0
      %2516 = vmatpush1.xpose.msra.mxu0 0.0
      %2517 = vmatprep.subr.mxu0 0.0
      %2518 = vmatpush1.xpose.msra.mxu0 0.0
      %2519 = vmatprep.subr.mxu0 0.0
      %2520 = vmatpush1.xpose.msra.mxu0 0.0
      %2521 = vmatprep.subr.mxu0 0.0
      %2522 = vmatpush1.xpose.msra.mxu0 0.0
      %2523 = vmatprep.subr.mxu0 0.0
      %2524 = vmatpush1.xpose.msra.mxu0 0.0
      %2525 = vmatprep.subr.mxu0 0.0
      %2526 = vmatpush1.xpose.msra.mxu0 0.0
      %2527 = vmatprep.subr.mxu0 0.0
      %2528 = vmatpush1.xpose.msra.mxu0 0.0
      %2529 = vmatprep.subr.mxu0 0.0
      %2530 = vmatpush1.xpose.msra.mxu0 0.0
      %2531 = vmatprep.subr.mxu0 0.0
      %2532 = vmatpush1.xpose.msra.mxu0 0.0
      %2533 = vmatprep.subr.mxu0 0.0
      %2534 = vmatpush1.xpose.msra.mxu0 0.0
      %2535 = vmatprep.subr.mxu0 0.0
      %2536 = vmatpush1.xpose.msra.mxu0 0.0
      %2537 = vmatprep.subr.mxu0 0.0
      %2538 = vmatpush1.xpose.msra.mxu0 0.0
      %2539 = vmatprep.subr.mxu0 0.0
      %2540 = vmatpush1.xpose.msra.mxu0 0.0
      %2541 = vmatprep.mubr.f32.mxu0 0.0
      %2542 = vmatmul.mubr.f32.gmra.mrb[0].mxu0 %v2451
      %v2543 = vpop.f32.mrb[0].mxu0
      %v2544 = vadd.f32 %v2447, %v2543
      %v2545 = vpop.f32.mrb[0].mxu0
      %2546 = vdwg.mxu0
      %v2547 = vld [vmem:[%s13] sm:$0xff]
      %v2548 = vld [vmem:[%s14] sm:$0xff]
      %2550 = vset.pattern.permute.xlu0 0
      %2551 = vperm.xlu0 %2550, %v2548
      %v2552 = vpop.permute.xlu0 %2551
      %v2555 = vsel %vm548, %v2547, 0
      %2557 = vmatprep.subr.mxu0 0.0
      %2558 = vmatpush1.msra.mxu0 %v2544
      %2559 = vmatprep.subr.mxu0 0.0
      %2560 = vmatpush1.msra.mxu0 0.0
      %2561 = vmatprep.subr.mxu0 0.0
      %2562 = vmatpush1.msra.mxu0 0.0
      %2563 = vmatprep.subr.mxu0 0.0
      %2564 = vmatpush1.msra.mxu0 0.0
      %2565 = vmatprep.subr.mxu0 0.0
      %2566 = vmatpush1.msra.mxu0 0.0
      %2567 = vmatprep.subr.mxu0 0.0
      %2568 = vmatpush1.msra.mxu0 0.0
      %2569 = vmatprep.subr.mxu0 0.0
      %2570 = vmatpush1.msra.mxu0 0.0
      %2571 = vmatprep.subr.mxu0 0.0
      %2572 = vmatpush1.msra.mxu0 0.0
      %2573 = vmatprep.subr.mxu0 0.0
      %2574 = vmatpush1.msra.mxu0 0.0
      %2575 = vmatprep.subr.mxu0 0.0
      %2576 = vmatpush1.msra.mxu0 0.0
      %2577 = vmatprep.subr.mxu0 0.0
      %2578 = vmatpush1.msra.mxu0 0.0
      %2579 = vmatprep.subr.mxu0 0.0
      %2580 = vmatpush1.msra.mxu0 0.0
      %2581 = vmatprep.subr.mxu0 0.0
      %2582 = vmatpush1.msra.mxu0 0.0
      %2583 = vmatprep.subr.mxu0 0.0
      %2584 = vmatpush1.msra.mxu0 0.0
      %2585 = vmatprep.subr.mxu0 0.0
      %2586 = vmatpush1.msra.mxu0 0.0
      %2587 = vmatprep.subr.mxu0 0.0
      %2588 = vmatpush1.msra.mxu0 0.0
      %2589 = vmatprep.subr.mxu0 0.0
      %2590 = vmatpush1.msra.mxu0 0.0
      %2591 = vmatprep.subr.mxu0 0.0
      %2592 = vmatpush1.msra.mxu0 0.0
      %2593 = vmatprep.subr.mxu0 0.0
      %2594 = vmatpush1.msra.mxu0 0.0
      %2595 = vmatprep.subr.mxu0 0.0
      %2596 = vmatpush1.msra.mxu0 0.0
      %2597 = vmatprep.subr.mxu0 0.0
      %2598 = vmatpush1.msra.mxu0 0.0
      %2599 = vmatprep.subr.mxu0 0.0
      %2600 = vmatpush1.msra.mxu0 0.0
      %2601 = vmatprep.subr.mxu0 0.0
      %2602 = vmatpush1.msra.mxu0 0.0
      %2603 = vmatprep.subr.mxu0 0.0
      %2604 = vmatpush1.msra.mxu0 0.0
      %2605 = vmatprep.subr.mxu0 0.0
      %2606 = vmatpush1.msra.mxu0 0.0
      %2607 = vmatprep.subr.mxu0 0.0
      %2608 = vmatpush1.msra.mxu0 0.0
      %2609 = vmatprep.subr.mxu0 0.0
      %2610 = vmatpush1.msra.mxu0 0.0
      %2611 = vmatprep.subr.mxu0 0.0
      %2612 = vmatpush1.msra.mxu0 0.0
      %2613 = vmatprep.subr.mxu0 0.0
      %2614 = vmatpush1.msra.mxu0 0.0
      %2615 = vmatprep.subr.mxu0 0.0
      %2616 = vmatpush1.msra.mxu0 0.0
      %2617 = vmatprep.subr.mxu0 0.0
      %2618 = vmatpush1.msra.mxu0 0.0
      %2619 = vmatprep.subr.mxu0 0.0
      %2620 = vmatpush1.msra.mxu0 0.0
      %2621 = vmatprep.mubr.f32.mxu0 0.0
      %2622 = vmatmul.mubr.f32.gmra.mrb[0].mxu0 %v2555
      %v2623 = vpop.f32.mrb[0].mxu0
      %v2624 = vadd.f32 %v2552, %v2623
      %v2625 = vpop.f32.mrb[0].mxu0
      %2626 = vdwg.mxu0
      %2628 = vset.pattern.permute.xlu0 0
      %2629 = vperm.xlu0 %2628, %v832
      %v2630 = vpop.permute.xlu0 %2629
      %v2632 = vmul.f32 %v2630, %v911
      %v2633 = vld [vmem:[%s15] sm:$0x1]
      %v2635 = vlaneseq
      %v2636 = vshrl.u32 %v2635, 7
      %v2637 = vsub.s32 0, %v2636
      %v2638 = vrot.slane %v2633, %v2637
      %2639 = vset.pattern.permute.xlu0 0
      %2640 = vperm.xlu0 %2639, %v2638
      %v2641 = vpop.permute.xlu0 %2640
      %v2643 = vmul.f32 %v2641, %v2632
      %v2644 = vmul.f32 %v2643, %v533
      %2645 = vset.pattern.permute.xlu0 1
      %2646 = vperm.xlu0 %2645, %v2638
      %v2647 = vpop.permute.xlu0 %2646
      %v2649 = vmul.f32 %v2647, %v2624
      %v2650 = vadd.f32 %v2644, %v2649
      %2651 = vst.msk [vmem:[%s532] sm:$0xff] %vm664, %v2650
      %p2652 = scmp.lt.s32.totalorder %s29, 1
      %s2653 = scalar_select %p2652, %s29, 1
      %s2654 = smul.addr %s2653, 8
      %s2655 = scalar_lea.vmem %s16, %s2654
      // Predicated region
      $region85: #{val_forward.1} parent=83 // pred_check
        %p2656 = pneg %p393
      $region86: #{val_forward.1} parent=83 // pred_check_branch
        %2658 = sbr.rel (%p2656) target = $region88
      $region87: #{val_forward.1} parent=83 // pred_region
        _
      $region88: #{val_forward.1} parent=83 // pred_fallthru
        _
    $region84: #{val_forward.1} parent=5 // pred_fallthru
      _
    %p2659 = scmp.le.s32.totalorder 2, %s24
    // Predicated region
    $region89: #{val_forward.1} parent=5 // pred_check
      %p2660 = pneg %p2659
    $region90: #{val_forward.1} parent=5 // pred_check_branch
      %2662 = sbr.rel (%p2660) target = $region92
    $region91: #{val_forward.1} parent=5 // pred_region
      %s2663 = ssub.s32 %s24, 2
      // Predicated region
      $region93: #{val_forward.1} parent=91 // pred_check
        %p2664 = pneg %p399
      $region94: #{val_forward.1} parent=91 // pred_check_branch
        %2666 = sbr.rel (%p2664) target = $region96
      $region95: #{val_forward.1} parent=91 // pred_region
        %p2667 = scmp.lt.s32.totalorder %s30, 1
        %s2668 = scalar_select %p2667, %s30, 1
        %s2669 = smul.addr %s2668, 8
        %s2670 = scalar_lea.vmem %s16, %s2669
      $region96: #{val_forward.1} parent=91 // pred_fallthru
        _
    $region92: #{val_forward.1} parent=5 // pred_fallthru
      _
  $region6: #{val_forward.1} parent=0 // loop_footer
    %s28 = sadd.s32 1, %s24
  $region7: #{val_forward.1} parent=0 // loop_footer_branch
    %23 = sbr.rel target = $region3
  $region8: #{val_forward.1} parent=0 // loop_exit
    _

</llo_original>
